<compile_context>
chip_gen: v7x
topology: tpu7x:2x2x1
jax: 0.10.0
libtpu: 0.0.40
codegen_flags: <defaults>
</compile_context>

<pallas_src>
import functools

import jax
import jax.numpy as jnp
from jax.experimental import pallas as pl
from jax.experimental.pallas import tpu as pltpu


def _round_up(x: int, m: int) -> int:
    return ((x + m - 1) // m) * m


# ----------------------------------------------------------------------------
# Kernel: one fused affine layer per batch tile.
# ----------------------------------------------------------------------------
def _fused_affine_kernel(x_ref, w_ref, b_ref, o_ref):
    # x: (bt, F), w: (F, 128), b: (1, 128), o: (bt, 1)
    y = jnp.dot(
        x_ref[...], w_ref[...],
        preferred_element_type=jnp.float32,
        precision=jax.lax.Precision.HIGHEST,     # free: MXU has huge slack
    ) + b_ref[...]
    # Only lane 0 of the 128-wide padded output is real; store it directly to
    # the (bt, 1) output block (masked store -- negligible, kernel is HBM-read
    # bound).  Rows past B in the last partial block are masked by Pallas and
    # never reach HBM.
    o_ref[...] = y[:, :1].astype(o_ref.dtype)


# ----------------------------------------------------------------------------
# One-time parameter preparation (hoisted out of the per-call forward path):
# collapse the all-linear eval-mode network; lane-pad only the scalar output.
# ----------------------------------------------------------------------------
def fuse_and_pad_params(params, input_size):
    """params: list of (W, b) with W:(in,out), b:(out,).  Returns effective
    weight (input_size, 128) and bias (1, 128), float32 (only column 0 real)."""
    hp = jax.lax.Precision.HIGHEST
    w_eff, b_eff = params[0]                       # (in, 1024), (1024,)
    for (w, b) in params[1:]:
        w_eff = jnp.dot(w_eff, w, precision=hp)    # (in, out_k)
        b_eff = jnp.dot(b_eff, w, precision=hp) + b
    # w_eff: (input_size, 1), b_eff: (1,)
    w_pad = jnp.zeros((input_size, 128), jnp.float32).at[:, :1].set(w_eff)
    b_pad = jnp.zeros((1, 128), jnp.float32).at[0, :1].set(b_eff)
    return w_pad, b_pad


# ----------------------------------------------------------------------------
# Forward pass.
# ----------------------------------------------------------------------------
@functools.partial(jax.jit, static_argnames=("batch_tile",))
def aesthetic_predictor_forward(x, w_pad, b_pad, *, batch_tile=1024):
    """x: (B, input_size) float32.  w_pad/b_pad from fuse_and_pad_params."""
    assert batch_tile % 8 == 0, "batch_tile must be a multiple of 8 (sublanes)"
    B, F = x.shape
    assert w_pad.shape == (F, 128) and b_pad.shape == (1, 128)

    # Adaptive batch tile: never bigger than needed, always a multiple of 8.
    bt = min(batch_tile, _round_up(B, 8))
    # v7x has 2 TensorCores sharing the "parallel" grid axis: guarantee >= 2
    # grid steps whenever the batch is big enough to split (harmless on
    # single-TC v5e/v6e).
    if B >= 16:
        bt = min(bt, max(8, _round_up(pl.cdiv(B, 2), 8)))

    grid = (pl.cdiv(B, bt),)                       # partial last block is OK

    x_spec = pl.BlockSpec((bt, F), lambda i: (i, 0))
    w_spec = pl.BlockSpec((F, 128), lambda i: (0, 0))    # resident across grid
    b_spec = pl.BlockSpec((1, 128), lambda i: (0, 0))    # resident across grid
    o_spec = pl.BlockSpec((bt, 1), lambda i: (i, 0))     # 4 B/row output

    out = pl.pallas_call(
        _fused_affine_kernel,
        out_shape=jax.ShapeDtypeStruct((B, 1), jnp.float32),
        grid_spec=pltpu.PrefetchScalarGridSpec(
            num_scalar_prefetch=0,
            grid=grid,
            in_specs=[x_spec, w_spec, b_spec],
            out_specs=o_spec,
        ),
        compiler_params=pltpu.CompilerParams(
            dimension_semantics=("parallel",)),
    )(x, w_pad, b_pad)

    return out                                     # (B, 1), no post-slice pass


# ----------------------------------------------------------------------------
# Test helpers.
# ----------------------------------------------------------------------------
def init_params(input_size, key):
    """Deterministic init mirroring nn.Linear default (uniform +/- 1/sqrt(fan_in))."""
    sizes = [(input_size, 1024), (1024, 128), (128, 64), (64, 16), (16, 1)]
    params = []
    for (fan_in, fan_out) in sizes:
        key, kw, kb = jax.random.split(key, 3)
        bound = 1.0 / jnp.sqrt(fan_in)
        w = jax.random.uniform(kw, (fan_in, fan_out), jnp.float32, -bound, bound)
        b = jax.random.uniform(kb, (fan_out,), jnp.float32, -bound, bound)
        params.append((w, b))
    return params


def reference_forward(x, params):
    h = x
    for (w, b) in params:
        # Dropout layers are identity in eval mode.
        h = jnp.dot(h, w, precision=jax.lax.Precision.HIGHEST) + b
    return h


if __name__ == "__main__":
    key = jax.random.PRNGKey(0)
    input_size = 768     # real CLIP ViT-L/14 embedding dim (lane-aligned path)

    kp, kx1, kx2 = jax.random.split(key, 3)
    params = init_params(input_size, kp)

    # Fuse once (hoisted out of the forward path), reuse across calls.
    w_pad, b_pad = jax.block_until_ready(fuse_and_pad_params(params, input_size))

    # Case 1: tiny batch -> single grid step with a partial (2-of-8-row) block.
    x1 = jax.random.normal(kx1, (2, input_size), jnp.float32)
    out1 = jax.block_until_ready(aesthetic_predictor_forward(x1, w_pad, b_pad))
    ref1 = reference_forward(x1, params)
    assert out1.shape == (2, 1), out1.shape
    assert jnp.allclose(out1, ref1, atol=5e-4, rtol=1e-3), (out1, ref1)

    # Case 2: mid batch -> >= 2 grid steps (v7x megacore path) + partial tail
    # block (20 rows with bt=16).
    x2 = jax.random.normal(kx2, (20, input_size), jnp.float32)
    out2 = jax.block_until_ready(aesthetic_predictor_forward(x2, w_pad, b_pad))
    ref2 = reference_forward(x2, params)
    assert out2.shape == (20, 1), out2.shape
    assert jnp.allclose(out2, ref2, atol=5e-4, rtol=1e-3), (out2, ref2)

    print("KERNEL_OK")
</pallas_src>

<mosaic_0001>
module attributes {stable_mosaic.version = 11 : i64} {
  func.func @_fused_affine_kernel(%arg0: i32, %arg1: memref<8x768xf32, #tpu.memory_space<vmem>>, %arg2: memref<768x128xf32, #tpu.memory_space<vmem>>, %arg3: memref<1x128xf32, #tpu.memory_space<vmem>>, %arg4: memref<8x1xf32, #tpu.memory_space<vmem>>) attributes {dimension_semantics = [#tpu.dimension_semantics<parallel>], iteration_bounds = array<i64: 1>, scalar_prefetch = 0 : i64, scratch_operands = 0 : i64, tpu.core_type = #tpu.core_type<tc>, window_params = [{transform_indices = @transform_0, window_bounds = array<i64: 8, 768>}, {pipeline_mode = #tpu.pipeline_mode<synchronous>, transform_indices = @transform_1, window_bounds = array<i64: 768, 128>}, {pipeline_mode = #tpu.pipeline_mode<synchronous>, transform_indices = @transform_2, window_bounds = array<i64: 1, 128>}, {transform_indices = @transform_3, window_bounds = array<i64: 8, 1>}]} {
    %c0 = arith.constant 0 : index
    %c0_0 = arith.constant 0 : index
    %0 = vector.load %arg1[%c0, %c0_0] : memref<8x768xf32, #tpu.memory_space<vmem>>, vector<8x768xf32>
    %c0_1 = arith.constant 0 : index
    %c0_2 = arith.constant 0 : index
    %1 = vector.load %arg2[%c0_1, %c0_2] : memref<768x128xf32, #tpu.memory_space<vmem>>, vector<768x128xf32>
    %cst = arith.constant dense<0.000000e+00> : vector<8x128xf32>
    %2 = tpu.matmul %0, %1, %cst {dimension_numbers = #tpu.dot_dimension_numbers<[1], [0], [0], [1], [0, 0, 1, 1], [], []>, precision = #tpu.contract_precision<fp32>} : vector<8x768xf32>, vector<768x128xf32>, vector<8x128xf32> -> vector<8x128xf32>
    %c0_3 = arith.constant 0 : index
    %c0_4 = arith.constant 0 : index
    %3 = vector.load %arg3[%c0_3, %c0_4] : memref<1x128xf32, #tpu.memory_space<vmem>>, vector<1x128xf32>
    %4 = vector.broadcast %3 : vector<1x128xf32> to vector<8x128xf32>
    %5 = arith.addf %2, %4 : vector<8x128xf32>
    %6 = vector.extract_strided_slice %5 {offsets = [0, 0], sizes = [8, 1], strides = [1, 1]} : vector<8x128xf32> to vector<8x1xf32>
    %c0_5 = arith.constant 0 : index
    %c0_6 = arith.constant 0 : index
    %7 = vector.load %arg4[%c0_5, %c0_6] : memref<8x1xf32, #tpu.memory_space<vmem>>, vector<8x1xf32>
    tpu.vector_store %arg4[%c0_5, %c0_6], %6 {strides = array<i32>} : memref<8x1xf32, #tpu.memory_space<vmem>>, vector<8x1xf32>,
    return
  }
  func.func @transform_0(%arg0: i32) -> (i32, i32) {
    %c0_i32 = arith.constant 0 : i32
    %c0_i32_0 = arith.constant 0 : i32
    return %arg0, %c0_i32 : i32, i32
  }
  func.func @transform_1(%arg0: i32) -> (i32, i32) {
    %c0_i32 = arith.constant 0 : i32
    %c0_i32_0 = arith.constant 0 : i32
    %c0_i32_1 = arith.constant 0 : i32
    return %c0_i32, %c0_i32_0 : i32, i32
  }
  func.func @transform_2(%arg0: i32) -> (i32, i32) {
    %c0_i32 = arith.constant 0 : i32
    %c0_i32_0 = arith.constant 0 : i32
    %c0_i32_1 = arith.constant 0 : i32
    return %c0_i32, %c0_i32_0 : i32, i32
  }
  func.func @transform_3(%arg0: i32) -> (i32, i32) {
    %c0_i32 = arith.constant 0 : i32
    %c0_i32_0 = arith.constant 0 : i32
    return %arg0, %c0_i32 : i32, i32
  }
}

</mosaic_0001>

<llo_original>
// kernel: aesthetic_predictor_forward.1
$region0: #{aesthetic_predictor_forward.1}
  #allocation0 [shape = 'u32[]', space=smem, size = 0x4, offset = 0x4, fixed_abs, tag = 'smem constant byte address 0x4 - core index']
  #allocation1 [shape = 'u32[144,128]{1,0:T(1,128)}', space=vmem, size = 0x12000, scoped, tag = 'internal scratch']
  %s0 = inlined_call_operand.hbm [shape: f32[2,768], index: 0, kind: input, shape index: {}]
  %s1 = inlined_call_operand.hbm [shape: f32[768,128], index: 1, kind: input, shape index: {}]
  %s2 = inlined_call_operand.vmem [shape: f32[1,128], index: 2, kind: input, shape index: {}]
  %s3 = inlined_call_operand.vmem [shape: f32[2,1], index: 3, kind: output, shape index: {}]
  %s4 = sld [smem:[#allocation0]]
  $region60: #{aesthetic_predictor_forward.1} parent=0
    _
  %s6 = ssub.s32 1, %s4
  %s7 = scalar_select 0, %s6, %s4
  $region1: #{aesthetic_predictor_forward.1} parent=0
    #allocation2 [shape = 'u8[24576]{0}', space=vmem, size = 0x6000, scoped, tag = 'input window, operand 0, single buffered']
    #allocation3 [shape = 's32[1]{0}', space=sflag, size = 0x4, scoped, tag = 'scoped memory for aesthetic_predictor_forward.1']
    #allocation4 [shape = 'u8[393216]{0}', space=vmem, size = 0x60000, scoped, tag = 'input window, operand 1, single buffered']
    #allocation5 [shape = 's32[1]{0}', space=sflag, size = 0x4, scoped, tag = 'scoped memory for aesthetic_predictor_forward.1']
    #allocation6 [shape = 'u8[4096]{0}', space=vmem, size = 0x1000, scoped, tag = 'output window, operand 0, single buffered']
    %8 = vsyncpa [#allocation3], 0
    %9 = vsyncpa [#allocation5], 0
    // Predicated region
    $region2: #{aesthetic_predictor_forward.1} parent=1 // pred_check
      _
    $region3: #{aesthetic_predictor_forward.1} parent=1 // pred_check_branch
      %11 = sbr.rel (0) target = $region5
    $region4: #{aesthetic_predictor_forward.1} parent=1 // pred_region
      %s13 = ssub.s32 768, 192
      %14 = vsyncadd [#allocation3], %s13
      %s15 = sshll.u32 [#allocation2], 4
      %s16 = int_to_ptr.vmem [resolvable:$true] %s15
      %21 = dma.hbm_to_vmem [thread:$0]  %s0, 192, %s16, [#allocation3], 192, 192, 12
    $region5: #{aesthetic_predictor_forward.1} parent=1 // pred_fallthru
      _
    // Predicated region
    $region6: #{aesthetic_predictor_forward.1} parent=1 // pred_check
      _
    $region7: #{aesthetic_predictor_forward.1} parent=1 // pred_check_branch
      %23 = sbr.rel (0) target = $region9
    $region8: #{aesthetic_predictor_forward.1} parent=1 // pred_region
      %s25 = ssub.s32 12288, 12288
      %26 = vsyncadd [#allocation5], %s25
      %s27 = sshll.u32 [#allocation4], 4
      %s28 = int_to_ptr.vmem [resolvable:$true] %s27
      %33 = dma.hbm_to_vmem [thread:$0]  %s1, 12288, %s28, [#allocation5], 128, 128, 8
    $region9: #{aesthetic_predictor_forward.1} parent=1 // pred_fallthru
      _
    // Predicated region
    $region10: #{aesthetic_predictor_forward.1} parent=1 // pred_check
      _
    $region11: #{aesthetic_predictor_forward.1} parent=1 // pred_check_branch
      %35 = sbr.rel (0) target = $region13
    $region12: #{aesthetic_predictor_forward.1} parent=1 // pred_region
      _
    $region13: #{aesthetic_predictor_forward.1} parent=1 // pred_fallthru
      _
    // Predicated region
    $region14: #{aesthetic_predictor_forward.1} parent=1 // pred_check
      _
    $region15: #{aesthetic_predictor_forward.1} parent=1 // pred_check_branch
      %37 = sbr.rel (0) target = $region17
    $region16: #{aesthetic_predictor_forward.1} parent=1 // pred_region
      %38 = dma.done [#allocation3], 768
    $region17: #{aesthetic_predictor_forward.1} parent=1 // pred_fallthru
      _
    // Predicated region
    $region18: #{aesthetic_predictor_forward.1} parent=1 // pred_check
      _
    $region19: #{aesthetic_predictor_forward.1} parent=1 // pred_check_branch
      %40 = sbr.rel (0) target = $region21
    $region20: #{aesthetic_predictor_forward.1} parent=1 // pred_region
      %41 = dma.done [#allocation5], 12288
    $region21: #{aesthetic_predictor_forward.1} parent=1 // pred_fallthru
      _
    %v42 = vld [vmem:[#allocation2] sm:$0xff]
    %v43 = vld [vmem:[#allocation2 + $0x8] sm:$0xf]
    %v44 = vld [vmem:[#allocation2 + $0xc] sm:$0xff]
    %v45 = vld [vmem:[#allocation2 + $0x14] sm:$0xf]
    %v46 = vld [vmem:[#allocation2 + $0x18] sm:$0xff]
    %v47 = vld [vmem:[#allocation2 + $0x20] sm:$0xf]
    %v48 = vld [vmem:[#allocation2 + $0x24] sm:$0xff]
    %v49 = vld [vmem:[#allocation2 + $0x2c] sm:$0xf]
    %v50 = vld [vmem:[#allocation4] sm:$0xff]
    %v51 = vld [vmem:[#allocation4 + $0x8] sm:$0xff]
    %v52 = vld [vmem:[#allocation4 + $0x10] sm:$0xff]
    %v53 = vld [vmem:[#allocation4 + $0x18] sm:$0xff]
    %v54 = vld [vmem:[#allocation4 + $0x20] sm:$0xff]
    %v55 = vld [vmem:[#allocation4 + $0x28] sm:$0xff]
    %v56 = vld [vmem:[#allocation4 + $0x30] sm:$0xff]
    %v57 = vld [vmem:[#allocation4 + $0x38] sm:$0xff]
    %v58 = vld [vmem:[#allocation4 + $0x40] sm:$0xff]
    %v59 = vld [vmem:[#allocation4 + $0x48] sm:$0xff]
    %v60 = vld [vmem:[#allocation4 + $0x50] sm:$0xff]
    %v61 = vld [vmem:[#allocation4 + $0x58] sm:$0xff]
    %v62 = vld [vmem:[#allocation4 + $0x60] sm:$0xff]
    %v63 = vld [vmem:[#allocation4 + $0x68] sm:$0xff]
    %v64 = vld [vmem:[#allocation4 + $0x70] sm:$0xff]
    %v65 = vld [vmem:[#allocation4 + $0x78] sm:$0xff]
    %v66 = vld [vmem:[#allocation4 + $0x80] sm:$0xff]
    %v67 = vld [vmem:[#allocation4 + $0x88] sm:$0xff]
    %v68 = vld [vmem:[#allocation4 + $0x90] sm:$0xff]
    %v69 = vld [vmem:[#allocation4 + $0x98] sm:$0xff]
    %v70 = vld [vmem:[#allocation4 + $0xa0] sm:$0xff]
    %v71 = vld [vmem:[#allocation4 + $0xa8] sm:$0xff]
    %v72 = vld [vmem:[#allocation4 + $0xb0] sm:$0xff]
    %v73 = vld [vmem:[#allocation4 + $0xb8] sm:$0xff]
    %v74 = vld [vmem:[#allocation4 + $0xc0] sm:$0xff]
    %v75 = vld [vmem:[#allocation4 + $0xc8] sm:$0xff]
    %v76 = vld [vmem:[#allocation4 + $0xd0] sm:$0xff]
    %v77 = vld [vmem:[#allocation4 + $0xd8] sm:$0xff]
    %v78 = vld [vmem:[#allocation4 + $0xe0] sm:$0xff]
    %v79 = vld [vmem:[#allocation4 + $0xe8] sm:$0xff]
    %v80 = vld [vmem:[#allocation4 + $0xf0] sm:$0xff]
    %v81 = vld [vmem:[#allocation4 + $0xf8] sm:$0xff]
    %v82 = vld [vmem:[#allocation4 + $0x100] sm:$0xff]
    %v83 = vld [vmem:[#allocation4 + $0x108] sm:$0xff]
    %v84 = vld [vmem:[#allocation4 + $0x110] sm:$0xff]
    %v85 = vld [vmem:[#allocation4 + $0x118] sm:$0xff]
    %v86 = vld [vmem:[#allocation4 + $0x120] sm:$0xff]
    %v87 = vld [vmem:[#allocation4 + $0x128] sm:$0xff]
    %v88 = vld [vmem:[#allocation4 + $0x130] sm:$0xff]
    %v89 = vld [vmem:[#allocation4 + $0x138] sm:$0xff]
    %v90 = vld [vmem:[#allocation4 + $0x140] sm:$0xff]
    %v91 = vld [vmem:[#allocation4 + $0x148] sm:$0xff]
    %v92 = vld [vmem:[#allocation4 + $0x150] sm:$0xff]
    %v93 = vld [vmem:[#allocation4 + $0x158] sm:$0xff]
    %v94 = vld [vmem:[#allocation4 + $0x160] sm:$0xff]
    %v95 = vld [vmem:[#allocation4 + $0x168] sm:$0xff]
    %v96 = vld [vmem:[#allocation4 + $0x170] sm:$0xff]
    %v97 = vld [vmem:[#allocation4 + $0x178] sm:$0xff]
    %v98 = vld [vmem:[#allocation4 + $0x180] sm:$0xff]
    %v99 = vld [vmem:[#allocation4 + $0x188] sm:$0xff]
    %v100 = vld [vmem:[#allocation4 + $0x190] sm:$0xff]
    %v101 = vld [vmem:[#allocation4 + $0x198] sm:$0xff]
    %v102 = vld [vmem:[#allocation4 + $0x1a0] sm:$0xff]
    %v103 = vld [vmem:[#allocation4 + $0x1a8] sm:$0xff]
    %v104 = vld [vmem:[#allocation4 + $0x1b0] sm:$0xff]
    %v105 = vld [vmem:[#allocation4 + $0x1b8] sm:$0xff]
    %v106 = vld [vmem:[#allocation4 + $0x1c0] sm:$0xff]
    %v107 = vld [vmem:[#allocation4 + $0x1c8] sm:$0xff]
    %v108 = vld [vmem:[#allocation4 + $0x1d0] sm:$0xff]
    %v109 = vld [vmem:[#allocation4 + $0x1d8] sm:$0xff]
    %v110 = vld [vmem:[#allocation4 + $0x1e0] sm:$0xff]
    %v111 = vld [vmem:[#allocation4 + $0x1e8] sm:$0xff]
    %v112 = vld [vmem:[#allocation4 + $0x1f0] sm:$0xff]
    %v113 = vld [vmem:[#allocation4 + $0x1f8] sm:$0xff]
    %v114 = vld [vmem:[#allocation4 + $0x200] sm:$0xff]
    %v115 = vld [vmem:[#allocation4 + $0x208] sm:$0xff]
    %v116 = vld [vmem:[#allocation4 + $0x210] sm:$0xff]
    %v117 = vld [vmem:[#allocation4 + $0x218] sm:$0xff]
    %v118 = vld [vmem:[#allocation4 + $0x220] sm:$0xff]
    %v119 = vld [vmem:[#allocation4 + $0x228] sm:$0xff]
    %v120 = vld [vmem:[#allocation4 + $0x230] sm:$0xff]
    %v121 = vld [vmem:[#allocation4 + $0x238] sm:$0xff]
    %v122 = vld [vmem:[#allocation4 + $0x240] sm:$0xff]
    %v123 = vld [vmem:[#allocation4 + $0x248] sm:$0xff]
    %v124 = vld [vmem:[#allocation4 + $0x250] sm:$0xff]
    %v125 = vld [vmem:[#allocation4 + $0x258] sm:$0xff]
    %v126 = vld [vmem:[#allocation4 + $0x260] sm:$0xff]
    %v127 = vld [vmem:[#allocation4 + $0x268] sm:$0xff]
    %v128 = vld [vmem:[#allocation4 + $0x270] sm:$0xff]
    %v129 = vld [vmem:[#allocation4 + $0x278] sm:$0xff]
    %v130 = vld [vmem:[#allocation4 + $0x280] sm:$0xff]
    %v131 = vld [vmem:[#allocation4 + $0x288] sm:$0xff]
    %v132 = vld [vmem:[#allocation4 + $0x290] sm:$0xff]
    %v133 = vld [vmem:[#allocation4 + $0x298] sm:$0xff]
    %v134 = vld [vmem:[#allocation4 + $0x2a0] sm:$0xff]
    %v135 = vld [vmem:[#allocation4 + $0x2a8] sm:$0xff]
    %v136 = vld [vmem:[#allocation4 + $0x2b0] sm:$0xff]
    %v137 = vld [vmem:[#allocation4 + $0x2b8] sm:$0xff]
    %v138 = vld [vmem:[#allocation4 + $0x2c0] sm:$0xff]
    %v139 = vld [vmem:[#allocation4 + $0x2c8] sm:$0xff]
    %v140 = vld [vmem:[#allocation4 + $0x2d0] sm:$0xff]
    %v141 = vld [vmem:[#allocation4 + $0x2d8] sm:$0xff]
    %v142 = vld [vmem:[#allocation4 + $0x2e0] sm:$0xff]
    %v143 = vld [vmem:[#allocation4 + $0x2e8] sm:$0xff]
    %v144 = vld [vmem:[#allocation4 + $0x2f0] sm:$0xff]
    %v145 = vld [vmem:[#allocation4 + $0x2f8] sm:$0xff]
    %v146 = vld [vmem:[%s2] sm:$0x1]
    %v148 = vlaneseq
    %v149 = vshrl.u32 %v148, 7
    %v150 = vsub.s32 0, %v149
    %v151 = vrot.slane %v146, %v150
    %v161 = vcombine.low %v42, %v44
    %v162 = vcombine.high %v42, %v44
    %v163 = vcombine.low %v46, %v48
    %v164 = vcombine.high %v46, %v48
    %v166 = vunpack.c.l.s4 1983009808
    %v167 = vunpack.c.0.s8 %v166
    %v168 = vlaneseq
    %v169 = vshrl.u32 %v168, 7
    %v170 = vsub.s32 %v167, %v169
    %v171 = vrot.slane %v161, %v170
    %v173 = vunpack.c.l.s4 1983009808
    %v174 = vunpack.c.0.s8 %v173
    %v175 = vlaneseq
    %v176 = vshrl.u32 %v175, 7
    %v177 = vsub.s32 %v174, %v176
    %v178 = vrot.slane %v162, %v177
    %v180 = vunpack.c.l.s4 1983009808
    %v181 = vunpack.c.0.s8 %v180
    %v182 = vlaneseq
    %v183 = vshrl.u32 %v182, 7
    %v184 = vsub.s32 %v181, %v183
    %v185 = vrot.slane %v163, %v184
    %v187 = vunpack.c.l.s4 1983009808
    %v188 = vunpack.c.0.s8 %v187
    %v189 = vlaneseq
    %v190 = vshrl.u32 %v189, 7
    %v191 = vsub.s32 %v188, %v190
    %v192 = vrot.slane %v164, %v191
    %v193 = vcombine.low %v171, %v185
    %v194 = vcombine.high %v171, %v185
    %v195 = vcombine.low %v178, %v192
    %v196 = vcombine.high %v178, %v192
    %v197 = vcombine.low %v43, %v45
    %v198 = vcombine.low %v47, %v49
    %v200 = vunpack.c.l.s4 1983009808
    %v201 = vunpack.c.0.s8 %v200
    %v202 = vlaneseq
    %v203 = vshrl.u32 %v202, 7
    %v204 = vsub.s32 %v201, %v203
    %v205 = vrot.slane %v197, %v204
    %v207 = vunpack.c.l.s4 1983009808
    %v208 = vunpack.c.0.s8 %v207
    %v209 = vlaneseq
    %v210 = vshrl.u32 %v209, 7
    %v211 = vsub.s32 %v208, %v210
    %v212 = vrot.slane %v198, %v211
    %v213 = vcombine.low %v205, %v212
    %v214 = vcombine.high %v205, %v212
    %221 = vmatprep.subr.mxu0 0.0
    %v222 = vand.u32 %v50, 4294901760
    %223 = vmatpush1.msra.mxu0 %v222
    %224 = vmatprep.subr.mxu0 0.0
    %v225 = vand.u32 %v51, 4294901760
    %226 = vmatpush1.msra.mxu0 %v225
    %227 = vmatprep.subr.mxu0 0.0
    %v228 = vand.u32 %v52, 4294901760
    %229 = vmatpush1.msra.mxu0 %v228
    %230 = vmatprep.subr.mxu0 0.0
    %v231 = vand.u32 %v53, 4294901760
    %232 = vmatpush1.msra.mxu0 %v231
    %233 = vmatprep.subr.mxu0 0.0
    %v234 = vand.u32 %v54, 4294901760
    %235 = vmatpush1.msra.mxu0 %v234
    %236 = vmatprep.subr.mxu0 0.0
    %v237 = vand.u32 %v55, 4294901760
    %238 = vmatpush1.msra.mxu0 %v237
    %239 = vmatprep.subr.mxu0 0.0
    %v240 = vand.u32 %v56, 4294901760
    %241 = vmatpush1.msra.mxu0 %v240
    %242 = vmatprep.subr.mxu0 0.0
    %v243 = vand.u32 %v57, 4294901760
    %244 = vmatpush1.msra.mxu0 %v243
    %245 = vmatprep.subr.mxu0 0.0
    %v246 = vand.u32 %v58, 4294901760
    %247 = vmatpush1.msra.mxu0 %v246
    %248 = vmatprep.subr.mxu0 0.0
    %v249 = vand.u32 %v59, 4294901760
    %250 = vmatpush1.msra.mxu0 %v249
    %251 = vmatprep.subr.mxu0 0.0
    %v252 = vand.u32 %v60, 4294901760
    %253 = vmatpush1.msra.mxu0 %v252
    %254 = vmatprep.subr.mxu0 0.0
    %v255 = vand.u32 %v61, 4294901760
    %256 = vmatpush1.msra.mxu0 %v255
    %257 = vmatprep.subr.mxu0 0.0
    %v258 = vand.u32 %v62, 4294901760
    %259 = vmatpush1.msra.mxu0 %v258
    %260 = vmatprep.subr.mxu0 0.0
    %v261 = vand.u32 %v63, 4294901760
    %262 = vmatpush1.msra.mxu0 %v261
    %263 = vmatprep.subr.mxu0 0.0
    %v264 = vand.u32 %v64, 4294901760
    %265 = vmatpush1.msra.mxu0 %v264
    %266 = vmatprep.subr.mxu0 0.0
    %v267 = vand.u32 %v65, 4294901760
    %268 = vmatpush1.msra.mxu0 %v267
    %269 = vmatprep.subr.mxu0 0.0
    %v270 = vand.u32 %v66, 4294901760
    %271 = vmatpush1.msra.mxu0 %v270
    %272 = vmatprep.subr.mxu0 0.0
    %v273 = vand.u32 %v67, 4294901760
    %274 = vmatpush1.msra.mxu0 %v273
    %275 = vmatprep.subr.mxu0 0.0
    %v276 = vand.u32 %v68, 4294901760
    %277 = vmatpush1.msra.mxu0 %v276
    %278 = vmatprep.subr.mxu0 0.0
    %v279 = vand.u32 %v69, 4294901760
    %280 = vmatpush1.msra.mxu0 %v279
    %281 = vmatprep.subr.mxu0 0.0
    %v282 = vand.u32 %v70, 4294901760
    %283 = vmatpush1.msra.mxu0 %v282
    %284 = vmatprep.subr.mxu0 0.0
    %v285 = vand.u32 %v71, 4294901760
    %286 = vmatpush1.msra.mxu0 %v285
    %287 = vmatprep.subr.mxu0 0.0
    %v288 = vand.u32 %v72, 4294901760
    %289 = vmatpush1.msra.mxu0 %v288
    %290 = vmatprep.subr.mxu0 0.0
    %v291 = vand.u32 %v73, 4294901760
    %292 = vmatpush1.msra.mxu0 %v291
    %293 = vmatprep.subr.mxu0 0.0
    %v294 = vand.u32 %v74, 4294901760
    %295 = vmatpush1.msra.mxu0 %v294
    %296 = vmatprep.subr.mxu0 0.0
    %v297 = vand.u32 %v75, 4294901760
    %298 = vmatpush1.msra.mxu0 %v297
    %299 = vmatprep.subr.mxu0 0.0
    %v300 = vand.u32 %v76, 4294901760
    %301 = vmatpush1.msra.mxu0 %v300
    %302 = vmatprep.subr.mxu0 0.0
    %v303 = vand.u32 %v77, 4294901760
    %304 = vmatpush1.msra.mxu0 %v303
    %305 = vmatprep.subr.mxu0 0.0
    %v306 = vand.u32 %v78, 4294901760
    %307 = vmatpush1.msra.mxu0 %v306
    %308 = vmatprep.subr.mxu0 0.0
    %v309 = vand.u32 %v79, 4294901760
    %310 = vmatpush1.msra.mxu0 %v309
    %311 = vmatprep.subr.mxu0 0.0
    %v312 = vand.u32 %v80, 4294901760
    %313 = vmatpush1.msra.mxu0 %v312
    %314 = vmatprep.subr.mxu0 0.0
    %v315 = vand.u32 %v81, 4294901760
    %316 = vmatpush1.msra.mxu0 %v315
    %v317 = vand.u32 %v194, 4294901760
    %v318 = vsub.f32 %v194, %v317
    %v319 = vand.u32 %v318, 4294901760
    %v320 = vsub.f32 %v318, %v319
    %v321 = vand.u32 %v320, 4294901760
    %322 = vmatprep.mubr.f32.mxu0 %v321
    %v323 = vand.u32 %v193, 4294901760
    %v324 = vsub.f32 %v193, %v323
    %v325 = vand.u32 %v324, 4294901760
    %v326 = vsub.f32 %v324, %v325
    %v327 = vand.u32 %v326, 4294901760
    %328 = vmatmul.mubr.f32.gmra.mrb[0].mxu0 %v327
    %v329 = vpop.f32.mrb[0].mxu0
    %v330 = vadd.f32 %v151, %v329
    %v331 = vpop.f32.mrb[0].mxu0
    %332 = vdwg.mxu0
    %333 = vmatprep.subr.mxu0 0.0
    %v334 = vand.u32 %v50, 4294901760
    %v335 = vsub.f32 %v50, %v334
    %v336 = vand.u32 %v335, 4294901760
    %v337 = vsub.f32 %v335, %v336
    %v338 = vand.u32 %v337, 4294901760
    %339 = vmatpush1.msra.mxu0 %v338
    %340 = vmatprep.subr.mxu0 0.0
    %v341 = vand.u32 %v51, 4294901760
    %v342 = vsub.f32 %v51, %v341
    %v343 = vand.u32 %v342, 4294901760
    %v344 = vsub.f32 %v342, %v343
    %v345 = vand.u32 %v344, 4294901760
    %346 = vmatpush1.msra.mxu0 %v345
    %347 = vmatprep.subr.mxu0 0.0
    %v348 = vand.u32 %v52, 4294901760
    %v349 = vsub.f32 %v52, %v348
    %v350 = vand.u32 %v349, 4294901760
    %v351 = vsub.f32 %v349, %v350
    %v352 = vand.u32 %v351, 4294901760
    %353 = vmatpush1.msra.mxu0 %v352
    %354 = vmatprep.subr.mxu0 0.0
    %v355 = vand.u32 %v53, 4294901760
    %v356 = vsub.f32 %v53, %v355
    %v357 = vand.u32 %v356, 4294901760
    %v358 = vsub.f32 %v356, %v357
    %v359 = vand.u32 %v358, 4294901760
    %360 = vmatpush1.msra.mxu0 %v359
    %361 = vmatprep.subr.mxu0 0.0
    %v362 = vand.u32 %v54, 4294901760
    %v363 = vsub.f32 %v54, %v362
    %v364 = vand.u32 %v363, 4294901760
    %v365 = vsub.f32 %v363, %v364
    %v366 = vand.u32 %v365, 4294901760
    %367 = vmatpush1.msra.mxu0 %v366
    %368 = vmatprep.subr.mxu0 0.0
    %v369 = vand.u32 %v55, 4294901760
    %v370 = vsub.f32 %v55, %v369
    %v371 = vand.u32 %v370, 4294901760
    %v372 = vsub.f32 %v370, %v371
    %v373 = vand.u32 %v372, 4294901760
    %374 = vmatpush1.msra.mxu0 %v373
    %375 = vmatprep.subr.mxu0 0.0
    %v376 = vand.u32 %v56, 4294901760
    %v377 = vsub.f32 %v56, %v376
    %v378 = vand.u32 %v377, 4294901760
    %v379 = vsub.f32 %v377, %v378
    %v380 = vand.u32 %v379, 4294901760
    %381 = vmatpush1.msra.mxu0 %v380
    %382 = vmatprep.subr.mxu0 0.0
    %v383 = vand.u32 %v57, 4294901760
    %v384 = vsub.f32 %v57, %v383
    %v385 = vand.u32 %v384, 4294901760
    %v386 = vsub.f32 %v384, %v385
    %v387 = vand.u32 %v386, 4294901760
    %388 = vmatpush1.msra.mxu0 %v387
    %389 = vmatprep.subr.mxu0 0.0
    %v390 = vand.u32 %v58, 4294901760
    %v391 = vsub.f32 %v58, %v390
    %v392 = vand.u32 %v391, 4294901760
    %v393 = vsub.f32 %v391, %v392
    %v394 = vand.u32 %v393, 4294901760
    %395 = vmatpush1.msra.mxu0 %v394
    %396 = vmatprep.subr.mxu0 0.0
    %v397 = vand.u32 %v59, 4294901760
    %v398 = vsub.f32 %v59, %v397
    %v399 = vand.u32 %v398, 4294901760
    %v400 = vsub.f32 %v398, %v399
    %v401 = vand.u32 %v400, 4294901760
    %402 = vmatpush1.msra.mxu0 %v401
    %403 = vmatprep.subr.mxu0 0.0
    %v404 = vand.u32 %v60, 4294901760
    %v405 = vsub.f32 %v60, %v404
    %v406 = vand.u32 %v405, 4294901760
    %v407 = vsub.f32 %v405, %v406
    %v408 = vand.u32 %v407, 4294901760
    %409 = vmatpush1.msra.mxu0 %v408
    %410 = vmatprep.subr.mxu0 0.0
    %v411 = vand.u32 %v61, 4294901760
    %v412 = vsub.f32 %v61, %v411
    %v413 = vand.u32 %v412, 4294901760
    %v414 = vsub.f32 %v412, %v413
    %v415 = vand.u32 %v414, 4294901760
    %416 = vmatpush1.msra.mxu0 %v415
    %417 = vmatprep.subr.mxu0 0.0
    %v418 = vand.u32 %v62, 4294901760
    %v419 = vsub.f32 %v62, %v418
    %v420 = vand.u32 %v419, 4294901760
    %v421 = vsub.f32 %v419, %v420
    %v422 = vand.u32 %v421, 4294901760
    %423 = vmatpush1.msra.mxu0 %v422
    %424 = vmatprep.subr.mxu0 0.0
    %v425 = vand.u32 %v63, 4294901760
    %v426 = vsub.f32 %v63, %v425
    %v427 = vand.u32 %v426, 4294901760
    %v428 = vsub.f32 %v426, %v427
    %v429 = vand.u32 %v428, 4294901760
    %430 = vmatpush1.msra.mxu0 %v429
    %431 = vmatprep.subr.mxu0 0.0
    %v432 = vand.u32 %v64, 4294901760
    %v433 = vsub.f32 %v64, %v432
    %v434 = vand.u32 %v433, 4294901760
    %v435 = vsub.f32 %v433, %v434
    %v436 = vand.u32 %v435, 4294901760
    %437 = vmatpush1.msra.mxu0 %v436
    %438 = vmatprep.subr.mxu0 0.0
    %v439 = vand.u32 %v65, 4294901760
    %v440 = vsub.f32 %v65, %v439
    %v441 = vand.u32 %v440, 4294901760
    %v442 = vsub.f32 %v440, %v441
    %v443 = vand.u32 %v442, 4294901760
    %444 = vmatpush1.msra.mxu0 %v443
    %445 = vmatprep.subr.mxu0 0.0
    %v446 = vand.u32 %v66, 4294901760
    %v447 = vsub.f32 %v66, %v446
    %v448 = vand.u32 %v447, 4294901760
    %v449 = vsub.f32 %v447, %v448
    %v450 = vand.u32 %v449, 4294901760
    %451 = vmatpush1.msra.mxu0 %v450
    %452 = vmatprep.subr.mxu0 0.0
    %v453 = vand.u32 %v67, 4294901760
    %v454 = vsub.f32 %v67, %v453
    %v455 = vand.u32 %v454, 4294901760
    %v456 = vsub.f32 %v454, %v455
    %v457 = vand.u32 %v456, 4294901760
    %458 = vmatpush1.msra.mxu0 %v457
    %459 = vmatprep.subr.mxu0 0.0
    %v460 = vand.u32 %v68, 4294901760
    %v461 = vsub.f32 %v68, %v460
    %v462 = vand.u32 %v461, 4294901760
    %v463 = vsub.f32 %v461, %v462
    %v464 = vand.u32 %v463, 4294901760
    %465 = vmatpush1.msra.mxu0 %v464
    %466 = vmatprep.subr.mxu0 0.0
    %v467 = vand.u32 %v69, 4294901760
    %v468 = vsub.f32 %v69, %v467
    %v469 = vand.u32 %v468, 4294901760
    %v470 = vsub.f32 %v468, %v469
    %v471 = vand.u32 %v470, 4294901760
    %472 = vmatpush1.msra.mxu0 %v471
    %473 = vmatprep.subr.mxu0 0.0
    %v474 = vand.u32 %v70, 4294901760
    %v475 = vsub.f32 %v70, %v474
    %v476 = vand.u32 %v475, 4294901760
    %v477 = vsub.f32 %v475, %v476
    %v478 = vand.u32 %v477, 4294901760
    %479 = vmatpush1.msra.mxu0 %v478
    %480 = vmatprep.subr.mxu0 0.0
    %v481 = vand.u32 %v71, 4294901760
    %v482 = vsub.f32 %v71, %v481
    %v483 = vand.u32 %v482, 4294901760
    %v484 = vsub.f32 %v482, %v483
    %v485 = vand.u32 %v484, 4294901760
    %486 = vmatpush1.msra.mxu0 %v485
    %487 = vmatprep.subr.mxu0 0.0
    %v488 = vand.u32 %v72, 4294901760
    %v489 = vsub.f32 %v72, %v488
    %v490 = vand.u32 %v489, 4294901760
    %v491 = vsub.f32 %v489, %v490
    %v492 = vand.u32 %v491, 4294901760
    %493 = vmatpush1.msra.mxu0 %v492
    %494 = vmatprep.subr.mxu0 0.0
    %v495 = vand.u32 %v73, 4294901760
    %v496 = vsub.f32 %v73, %v495
    %v497 = vand.u32 %v496, 4294901760
    %v498 = vsub.f32 %v496, %v497
    %v499 = vand.u32 %v498, 4294901760
    %500 = vmatpush1.msra.mxu0 %v499
    %501 = vmatprep.subr.mxu0 0.0
    %v502 = vand.u32 %v74, 4294901760
    %v503 = vsub.f32 %v74, %v502
    %v504 = vand.u32 %v503, 4294901760
    %v505 = vsub.f32 %v503, %v504
    %v506 = vand.u32 %v505, 4294901760
    %507 = vmatpush1.msra.mxu0 %v506
    %508 = vmatprep.subr.mxu0 0.0
    %v509 = vand.u32 %v75, 4294901760
    %v510 = vsub.f32 %v75, %v509
    %v511 = vand.u32 %v510, 4294901760
    %v512 = vsub.f32 %v510, %v511
    %v513 = vand.u32 %v512, 4294901760
    %514 = vmatpush1.msra.mxu0 %v513
    %515 = vmatprep.subr.mxu0 0.0
    %v516 = vand.u32 %v76, 4294901760
    %v517 = vsub.f32 %v76, %v516
    %v518 = vand.u32 %v517, 4294901760
    %v519 = vsub.f32 %v517, %v518
    %v520 = vand.u32 %v519, 4294901760
    %521 = vmatpush1.msra.mxu0 %v520
    %522 = vmatprep.subr.mxu0 0.0
    %v523 = vand.u32 %v77, 4294901760
    %v524 = vsub.f32 %v77, %v523
    %v525 = vand.u32 %v524, 4294901760
    %v526 = vsub.f32 %v524, %v525
    %v527 = vand.u32 %v526, 4294901760
    %528 = vmatpush1.msra.mxu0 %v527
    %529 = vmatprep.subr.mxu0 0.0
    %v530 = vand.u32 %v78, 4294901760
    %v531 = vsub.f32 %v78, %v530
    %v532 = vand.u32 %v531, 4294901760
    %v533 = vsub.f32 %v531, %v532
    %v534 = vand.u32 %v533, 4294901760
    %535 = vmatpush1.msra.mxu0 %v534
    %536 = vmatprep.subr.mxu0 0.0
    %v537 = vand.u32 %v79, 4294901760
    %v538 = vsub.f32 %v79, %v537
    %v539 = vand.u32 %v538, 4294901760
    %v540 = vsub.f32 %v538, %v539
    %v541 = vand.u32 %v540, 4294901760
    %542 = vmatpush1.msra.mxu0 %v541
    %543 = vmatprep.subr.mxu0 0.0
    %v544 = vand.u32 %v80, 4294901760
    %v545 = vsub.f32 %v80, %v544
    %v546 = vand.u32 %v545, 4294901760
    %v547 = vsub.f32 %v545, %v546
    %v548 = vand.u32 %v547, 4294901760
    %549 = vmatpush1.msra.mxu0 %v548
    %550 = vmatprep.subr.mxu0 0.0
    %v551 = vand.u32 %v81, 4294901760
    %v552 = vsub.f32 %v81, %v551
    %v553 = vand.u32 %v552, 4294901760
    %v554 = vsub.f32 %v552, %v553
    %v555 = vand.u32 %v554, 4294901760
    %556 = vmatpush1.msra.mxu0 %v555
    %v557 = vand.u32 %v194, 4294901760
    %558 = vmatprep.mubr.f32.mxu0 %v557
    %v559 = vand.u32 %v193, 4294901760
    %560 = vmatmul.mubr.f32.gmra.mrb[0].mxu0 %v559
    %v561 = vpop.f32.mrb[0].mxu0
    %v562 = vadd.f32 %v330, %v561
    %v563 = vpop.f32.mrb[0].mxu0
    %564 = vdwg.mxu0
    %565 = vmatprep.subr.mxu0 0.0
    %v566 = vand.u32 %v50, 4294901760
    %v567 = vsub.f32 %v50, %v566
    %568 = vmatpush1.msra.mxu0 %v567
    %569 = vmatprep.subr.mxu0 0.0
    %v570 = vand.u32 %v51, 4294901760
    %v571 = vsub.f32 %v51, %v570
    %572 = vmatpush1.msra.mxu0 %v571
    %573 = vmatprep.subr.mxu0 0.0
    %v574 = vand.u32 %v52, 4294901760
    %v575 = vsub.f32 %v52, %v574
    %576 = vmatpush1.msra.mxu0 %v575
    %577 = vmatprep.subr.mxu0 0.0
    %v578 = vand.u32 %v53, 4294901760
    %v579 = vsub.f32 %v53, %v578
    %580 = vmatpush1.msra.mxu0 %v579
    %581 = vmatprep.subr.mxu0 0.0
    %v582 = vand.u32 %v54, 4294901760
    %v583 = vsub.f32 %v54, %v582
    %584 = vmatpush1.msra.mxu0 %v583
    %585 = vmatprep.subr.mxu0 0.0
    %v586 = vand.u32 %v55, 4294901760
    %v587 = vsub.f32 %v55, %v586
    %588 = vmatpush1.msra.mxu0 %v587
    %589 = vmatprep.subr.mxu0 0.0
    %v590 = vand.u32 %v56, 4294901760
    %v591 = vsub.f32 %v56, %v590
    %592 = vmatpush1.msra.mxu0 %v591
    %593 = vmatprep.subr.mxu0 0.0
    %v594 = vand.u32 %v57, 4294901760
    %v595 = vsub.f32 %v57, %v594
    %596 = vmatpush1.msra.mxu0 %v595
    %597 = vmatprep.subr.mxu0 0.0
    %v598 = vand.u32 %v58, 4294901760
    %v599 = vsub.f32 %v58, %v598
    %600 = vmatpush1.msra.mxu0 %v599
    %601 = vmatprep.subr.mxu0 0.0
    %v602 = vand.u32 %v59, 4294901760
    %v603 = vsub.f32 %v59, %v602
    %604 = vmatpush1.msra.mxu0 %v603
    %605 = vmatprep.subr.mxu0 0.0
    %v606 = vand.u32 %v60, 4294901760
    %v607 = vsub.f32 %v60, %v606
    %608 = vmatpush1.msra.mxu0 %v607
    %609 = vmatprep.subr.mxu0 0.0
    %v610 = vand.u32 %v61, 4294901760
    %v611 = vsub.f32 %v61, %v610
    %612 = vmatpush1.msra.mxu0 %v611
    %613 = vmatprep.subr.mxu0 0.0
    %v614 = vand.u32 %v62, 4294901760
    %v615 = vsub.f32 %v62, %v614
    %616 = vmatpush1.msra.mxu0 %v615
    %617 = vmatprep.subr.mxu0 0.0
    %v618 = vand.u32 %v63, 4294901760
    %v619 = vsub.f32 %v63, %v618
    %620 = vmatpush1.msra.mxu0 %v619
    %621 = vmatprep.subr.mxu0 0.0
    %v622 = vand.u32 %v64, 4294901760
    %v623 = vsub.f32 %v64, %v622
    %624 = vmatpush1.msra.mxu0 %v623
    %625 = vmatprep.subr.mxu0 0.0
    %v626 = vand.u32 %v65, 4294901760
    %v627 = vsub.f32 %v65, %v626
    %628 = vmatpush1.msra.mxu0 %v627
    %629 = vmatprep.subr.mxu0 0.0
    %v630 = vand.u32 %v66, 4294901760
    %v631 = vsub.f32 %v66, %v630
    %632 = vmatpush1.msra.mxu0 %v631
    %633 = vmatprep.subr.mxu0 0.0
    %v634 = vand.u32 %v67, 4294901760
    %v635 = vsub.f32 %v67, %v634
    %636 = vmatpush1.msra.mxu0 %v635
    %637 = vmatprep.subr.mxu0 0.0
    %v638 = vand.u32 %v68, 4294901760
    %v639 = vsub.f32 %v68, %v638
    %640 = vmatpush1.msra.mxu0 %v639
    %641 = vmatprep.subr.mxu0 0.0
    %v642 = vand.u32 %v69, 4294901760
    %v643 = vsub.f32 %v69, %v642
    %644 = vmatpush1.msra.mxu0 %v643
    %645 = vmatprep.subr.mxu0 0.0
    %v646 = vand.u32 %v70, 4294901760
    %v647 = vsub.f32 %v70, %v646
    %648 = vmatpush1.msra.mxu0 %v647
    %649 = vmatprep.subr.mxu0 0.0
    %v650 = vand.u32 %v71, 4294901760
    %v651 = vsub.f32 %v71, %v650
    %652 = vmatpush1.msra.mxu0 %v651
    %653 = vmatprep.subr.mxu0 0.0
    %v654 = vand.u32 %v72, 4294901760
    %v655 = vsub.f32 %v72, %v654
    %656 = vmatpush1.msra.mxu0 %v655
    %657 = vmatprep.subr.mxu0 0.0
    %v658 = vand.u32 %v73, 4294901760
    %v659 = vsub.f32 %v73, %v658
    %660 = vmatpush1.msra.mxu0 %v659
    %661 = vmatprep.subr.mxu0 0.0
    %v662 = vand.u32 %v74, 4294901760
    %v663 = vsub.f32 %v74, %v662
    %664 = vmatpush1.msra.mxu0 %v663
    %665 = vmatprep.subr.mxu0 0.0
    %v666 = vand.u32 %v75, 4294901760
    %v667 = vsub.f32 %v75, %v666
    %668 = vmatpush1.msra.mxu0 %v667
    %669 = vmatprep.subr.mxu0 0.0
    %v670 = vand.u32 %v76, 4294901760
    %v671 = vsub.f32 %v76, %v670
    %672 = vmatpush1.msra.mxu0 %v671
    %673 = vmatprep.subr.mxu0 0.0
    %v674 = vand.u32 %v77, 4294901760
    %v675 = vsub.f32 %v77, %v674
    %676 = vmatpush1.msra.mxu0 %v675
    %677 = vmatprep.subr.mxu0 0.0
    %v678 = vand.u32 %v78, 4294901760
    %v679 = vsub.f32 %v78, %v678
    %680 = vmatpush1.msra.mxu0 %v679
    %681 = vmatprep.subr.mxu0 0.0
    %v682 = vand.u32 %v79, 4294901760
    %v683 = vsub.f32 %v79, %v682
    %684 = vmatpush1.msra.mxu0 %v683
    %685 = vmatprep.subr.mxu0 0.0
    %v686 = vand.u32 %v80, 4294901760
    %v687 = vsub.f32 %v80, %v686
    %688 = vmatpush1.msra.mxu0 %v687
    %689 = vmatprep.subr.mxu0 0.0
    %v690 = vand.u32 %v81, 4294901760
    %v691 = vsub.f32 %v81, %v690
    %692 = vmatpush1.msra.mxu0 %v691
    %v693 = vand.u32 %v194, 4294901760
    %v694 = vsub.f32 %v194, %v693
    %695 = vmatprep.mubr.f32.mxu0 %v694
    %v696 = vand.u32 %v193, 4294901760
    %v697 = vsub.f32 %v193, %v696
    %698 = vmatmul.mubr.f32.gmra.mrb[0].mxu0 %v697
    %v699 = vpop.f32.mrb[0].mxu0
    %v700 = vadd.f32 %v562, %v699
    %v701 = vpop.f32.mrb[0].mxu0
    %702 = vdwg.mxu0
    %703 = vmatprep.subr.mxu0 0.0
    %v704 = vand.u32 %v50, 4294901760
    %705 = vmatpush1.msra.mxu0 %v704
    %706 = vmatprep.subr.mxu0 0.0
    %v707 = vand.u32 %v51, 4294901760
    %708 = vmatpush1.msra.mxu0 %v707
    %709 = vmatprep.subr.mxu0 0.0
    %v710 = vand.u32 %v52, 4294901760
    %711 = vmatpush1.msra.mxu0 %v710
    %712 = vmatprep.subr.mxu0 0.0
    %v713 = vand.u32 %v53, 4294901760
    %714 = vmatpush1.msra.mxu0 %v713
    %715 = vmatprep.subr.mxu0 0.0
    %v716 = vand.u32 %v54, 4294901760
    %717 = vmatpush1.msra.mxu0 %v716
    %718 = vmatprep.subr.mxu0 0.0
    %v719 = vand.u32 %v55, 4294901760
    %720 = vmatpush1.msra.mxu0 %v719
    %721 = vmatprep.subr.mxu0 0.0
    %v722 = vand.u32 %v56, 4294901760
    %723 = vmatpush1.msra.mxu0 %v722
    %724 = vmatprep.subr.mxu0 0.0
    %v725 = vand.u32 %v57, 4294901760
    %726 = vmatpush1.msra.mxu0 %v725
    %727 = vmatprep.subr.mxu0 0.0
    %v728 = vand.u32 %v58, 4294901760
    %729 = vmatpush1.msra.mxu0 %v728
    %730 = vmatprep.subr.mxu0 0.0
    %v731 = vand.u32 %v59, 4294901760
    %732 = vmatpush1.msra.mxu0 %v731
    %733 = vmatprep.subr.mxu0 0.0
    %v734 = vand.u32 %v60, 4294901760
    %735 = vmatpush1.msra.mxu0 %v734
    %736 = vmatprep.subr.mxu0 0.0
    %v737 = vand.u32 %v61, 4294901760
    %738 = vmatpush1.msra.mxu0 %v737
    %739 = vmatprep.subr.mxu0 0.0
    %v740 = vand.u32 %v62, 4294901760
    %741 = vmatpush1.msra.mxu0 %v740
    %742 = vmatprep.subr.mxu0 0.0
    %v743 = vand.u32 %v63, 4294901760
    %744 = vmatpush1.msra.mxu0 %v743
    %745 = vmatprep.subr.mxu0 0.0
    %v746 = vand.u32 %v64, 4294901760
    %747 = vmatpush1.msra.mxu0 %v746
    %748 = vmatprep.subr.mxu0 0.0
    %v749 = vand.u32 %v65, 4294901760
    %750 = vmatpush1.msra.mxu0 %v749
    %751 = vmatprep.subr.mxu0 0.0
    %v752 = vand.u32 %v66, 4294901760
    %753 = vmatpush1.msra.mxu0 %v752
    %754 = vmatprep.subr.mxu0 0.0
    %v755 = vand.u32 %v67, 4294901760
    %756 = vmatpush1.msra.mxu0 %v755
    %757 = vmatprep.subr.mxu0 0.0
    %v758 = vand.u32 %v68, 4294901760
    %759 = vmatpush1.msra.mxu0 %v758
    %760 = vmatprep.subr.mxu0 0.0
    %v761 = vand.u32 %v69, 4294901760
    %762 = vmatpush1.msra.mxu0 %v761
    %763 = vmatprep.subr.mxu0 0.0
    %v764 = vand.u32 %v70, 4294901760
    %765 = vmatpush1.msra.mxu0 %v764
    %766 = vmatprep.subr.mxu0 0.0
    %v767 = vand.u32 %v71, 4294901760
    %768 = vmatpush1.msra.mxu0 %v767
    %769 = vmatprep.subr.mxu0 0.0
    %v770 = vand.u32 %v72, 4294901760
    %771 = vmatpush1.msra.mxu0 %v770
    %772 = vmatprep.subr.mxu0 0.0
    %v773 = vand.u32 %v73, 4294901760
    %774 = vmatpush1.msra.mxu0 %v773
    %775 = vmatprep.subr.mxu0 0.0
    %v776 = vand.u32 %v74, 4294901760
    %777 = vmatpush1.msra.mxu0 %v776
    %778 = vmatprep.subr.mxu0 0.0
    %v779 = vand.u32 %v75, 4294901760
    %780 = vmatpush1.msra.mxu0 %v779
    %781 = vmatprep.subr.mxu0 0.0
    %v782 = vand.u32 %v76, 4294901760
    %783 = vmatpush1.msra.mxu0 %v782
    %784 = vmatprep.subr.mxu0 0.0
    %v785 = vand.u32 %v77, 4294901760
    %786 = vmatpush1.msra.mxu0 %v785
    %787 = vmatprep.subr.mxu0 0.0
    %v788 = vand.u32 %v78, 4294901760
    %789 = vmatpush1.msra.mxu0 %v788
    %790 = vmatprep.subr.mxu0 0.0
    %v791 = vand.u32 %v79, 4294901760
    %792 = vmatpush1.msra.mxu0 %v791
    %793 = vmatprep.subr.mxu0 0.0
    %v794 = vand.u32 %v80, 4294901760
    %795 = vmatpush1.msra.mxu0 %v794
    %796 = vmatprep.subr.mxu0 0.0
    %v797 = vand.u32 %v81, 4294901760
    %798 = vmatpush1.msra.mxu0 %v797
    %v799 = vand.u32 %v194, 4294901760
    %v800 = vsub.f32 %v194, %v799
    %v801 = vand.u32 %v800, 4294901760
    %802 = vmatprep.mubr.f32.mxu0 %v801
    %v803 = vand.u32 %v193, 4294901760
    %v804 = vsub.f32 %v193, %v803
    %v805 = vand.u32 %v804, 4294901760
    %806 = vmatmul.mubr.f32.gmra.mrb[0].mxu0 %v805
    %v807 = vpop.f32.mrb[0].mxu0
    %v808 = vadd.f32 %v700, %v807
    %v809 = vpop.f32.mrb[0].mxu0
    %810 = vdwg.mxu0
    %811 = vmatprep.subr.mxu0 0.0
    %v812 = vand.u32 %v50, 4294901760
    %v813 = vsub.f32 %v50, %v812
    %v814 = vand.u32 %v813, 4294901760
    %815 = vmatpush1.msra.mxu0 %v814
    %816 = vmatprep.subr.mxu0 0.0
    %v817 = vand.u32 %v51, 4294901760
    %v818 = vsub.f32 %v51, %v817
    %v819 = vand.u32 %v818, 4294901760
    %820 = vmatpush1.msra.mxu0 %v819
    %821 = vmatprep.subr.mxu0 0.0
    %v822 = vand.u32 %v52, 4294901760
    %v823 = vsub.f32 %v52, %v822
    %v824 = vand.u32 %v823, 4294901760
    %825 = vmatpush1.msra.mxu0 %v824
    %826 = vmatprep.subr.mxu0 0.0
    %v827 = vand.u32 %v53, 4294901760
    %v828 = vsub.f32 %v53, %v827
    %v829 = vand.u32 %v828, 4294901760
    %830 = vmatpush1.msra.mxu0 %v829
    %831 = vmatprep.subr.mxu0 0.0
    %v832 = vand.u32 %v54, 4294901760
    %v833 = vsub.f32 %v54, %v832
    %v834 = vand.u32 %v833, 4294901760
    %835 = vmatpush1.msra.mxu0 %v834
    %836 = vmatprep.subr.mxu0 0.0
    %v837 = vand.u32 %v55, 4294901760
    %v838 = vsub.f32 %v55, %v837
    %v839 = vand.u32 %v838, 4294901760
    %840 = vmatpush1.msra.mxu0 %v839
    %841 = vmatprep.subr.mxu0 0.0
    %v842 = vand.u32 %v56, 4294901760
    %v843 = vsub.f32 %v56, %v842
    %v844 = vand.u32 %v843, 4294901760
    %845 = vmatpush1.msra.mxu0 %v844
    %846 = vmatprep.subr.mxu0 0.0
    %v847 = vand.u32 %v57, 4294901760
    %v848 = vsub.f32 %v57, %v847
    %v849 = vand.u32 %v848, 4294901760
    %850 = vmatpush1.msra.mxu0 %v849
    %851 = vmatprep.subr.mxu0 0.0
    %v852 = vand.u32 %v58, 4294901760
    %v853 = vsub.f32 %v58, %v852
    %v854 = vand.u32 %v853, 4294901760
    %855 = vmatpush1.msra.mxu0 %v854
    %856 = vmatprep.subr.mxu0 0.0
    %v857 = vand.u32 %v59, 4294901760
    %v858 = vsub.f32 %v59, %v857
    %v859 = vand.u32 %v858, 4294901760
    %860 = vmatpush1.msra.mxu0 %v859
    %861 = vmatprep.subr.mxu0 0.0
    %v862 = vand.u32 %v60, 4294901760
    %v863 = vsub.f32 %v60, %v862
    %v864 = vand.u32 %v863, 4294901760
    %865 = vmatpush1.msra.mxu0 %v864
    %866 = vmatprep.subr.mxu0 0.0
    %v867 = vand.u32 %v61, 4294901760
    %v868 = vsub.f32 %v61, %v867
    %v869 = vand.u32 %v868, 4294901760
    %870 = vmatpush1.msra.mxu0 %v869
    %871 = vmatprep.subr.mxu0 0.0
    %v872 = vand.u32 %v62, 4294901760
    %v873 = vsub.f32 %v62, %v872
    %v874 = vand.u32 %v873, 4294901760
    %875 = vmatpush1.msra.mxu0 %v874
    %876 = vmatprep.subr.mxu0 0.0
    %v877 = vand.u32 %v63, 4294901760
    %v878 = vsub.f32 %v63, %v877
    %v879 = vand.u32 %v878, 4294901760
    %880 = vmatpush1.msra.mxu0 %v879
    %881 = vmatprep.subr.mxu0 0.0
    %v882 = vand.u32 %v64, 4294901760
    %v883 = vsub.f32 %v64, %v882
    %v884 = vand.u32 %v883, 4294901760
    %885 = vmatpush1.msra.mxu0 %v884
    %886 = vmatprep.subr.mxu0 0.0
    %v887 = vand.u32 %v65, 4294901760
    %v888 = vsub.f32 %v65, %v887
    %v889 = vand.u32 %v888, 4294901760
    %890 = vmatpush1.msra.mxu0 %v889
    %891 = vmatprep.subr.mxu0 0.0
    %v892 = vand.u32 %v66, 4294901760
    %v893 = vsub.f32 %v66, %v892
    %v894 = vand.u32 %v893, 4294901760
    %895 = vmatpush1.msra.mxu0 %v894
    %896 = vmatprep.subr.mxu0 0.0
    %v897 = vand.u32 %v67, 4294901760
    %v898 = vsub.f32 %v67, %v897
    %v899 = vand.u32 %v898, 4294901760
    %900 = vmatpush1.msra.mxu0 %v899
    %901 = vmatprep.subr.mxu0 0.0
    %v902 = vand.u32 %v68, 4294901760
    %v903 = vsub.f32 %v68, %v902
    %v904 = vand.u32 %v903, 4294901760
    %905 = vmatpush1.msra.mxu0 %v904
    %906 = vmatprep.subr.mxu0 0.0
    %v907 = vand.u32 %v69, 4294901760
    %v908 = vsub.f32 %v69, %v907
    %v909 = vand.u32 %v908, 4294901760
    %910 = vmatpush1.msra.mxu0 %v909
    %911 = vmatprep.subr.mxu0 0.0
    %v912 = vand.u32 %v70, 4294901760
    %v913 = vsub.f32 %v70, %v912
    %v914 = vand.u32 %v913, 4294901760
    %915 = vmatpush1.msra.mxu0 %v914
    %916 = vmatprep.subr.mxu0 0.0
    %v917 = vand.u32 %v71, 4294901760
    %v918 = vsub.f32 %v71, %v917
    %v919 = vand.u32 %v918, 4294901760
    %920 = vmatpush1.msra.mxu0 %v919
    %921 = vmatprep.subr.mxu0 0.0
    %v922 = vand.u32 %v72, 4294901760
    %v923 = vsub.f32 %v72, %v922
    %v924 = vand.u32 %v923, 4294901760
    %925 = vmatpush1.msra.mxu0 %v924
    %926 = vmatprep.subr.mxu0 0.0
    %v927 = vand.u32 %v73, 4294901760
    %v928 = vsub.f32 %v73, %v927
    %v929 = vand.u32 %v928, 4294901760
    %930 = vmatpush1.msra.mxu0 %v929
    %931 = vmatprep.subr.mxu0 0.0
    %v932 = vand.u32 %v74, 4294901760
    %v933 = vsub.f32 %v74, %v932
    %v934 = vand.u32 %v933, 4294901760
    %935 = vmatpush1.msra.mxu0 %v934
    %936 = vmatprep.subr.mxu0 0.0
    %v937 = vand.u32 %v75, 4294901760
    %v938 = vsub.f32 %v75, %v937
    %v939 = vand.u32 %v938, 4294901760
    %940 = vmatpush1.msra.mxu0 %v939
    %941 = vmatprep.subr.mxu0 0.0
    %v942 = vand.u32 %v76, 4294901760
    %v943 = vsub.f32 %v76, %v942
    %v944 = vand.u32 %v943, 4294901760
    %945 = vmatpush1.msra.mxu0 %v944
    %946 = vmatprep.subr.mxu0 0.0
    %v947 = vand.u32 %v77, 4294901760
    %v948 = vsub.f32 %v77, %v947
    %v949 = vand.u32 %v948, 4294901760
    %950 = vmatpush1.msra.mxu0 %v949
    %951 = vmatprep.subr.mxu0 0.0
    %v952 = vand.u32 %v78, 4294901760
    %v953 = vsub.f32 %v78, %v952
    %v954 = vand.u32 %v953, 4294901760
    %955 = vmatpush1.msra.mxu0 %v954
    %956 = vmatprep.subr.mxu0 0.0
    %v957 = vand.u32 %v79, 4294901760
    %v958 = vsub.f32 %v79, %v957
    %v959 = vand.u32 %v958, 4294901760
    %960 = vmatpush1.msra.mxu0 %v959
    %961 = vmatprep.subr.mxu0 0.0
    %v962 = vand.u32 %v80, 4294901760
    %v963 = vsub.f32 %v80, %v962
    %v964 = vand.u32 %v963, 4294901760
    %965 = vmatpush1.msra.mxu0 %v964
    %966 = vmatprep.subr.mxu0 0.0
    %v967 = vand.u32 %v81, 4294901760
    %v968 = vsub.f32 %v81, %v967
    %v969 = vand.u32 %v968, 4294901760
    %970 = vmatpush1.msra.mxu0 %v969
    %v971 = vand.u32 %v194, 4294901760
    %972 = vmatprep.mubr.f32.mxu0 %v971
    %v973 = vand.u32 %v193, 4294901760
    %974 = vmatmul.mubr.f32.gmra.mrb[0].mxu0 %v973
    %v975 = vpop.f32.mrb[0].mxu0
    %v976 = vadd.f32 %v808, %v975
    %v977 = vpop.f32.mrb[0].mxu0
    %978 = vdwg.mxu0
    %979 = vmatprep.subr.mxu0 0.0
    %v980 = vand.u32 %v50, 4294901760
    %981 = vmatpush1.msra.mxu0 %v980
    %982 = vmatprep.subr.mxu0 0.0
    %v983 = vand.u32 %v51, 4294901760
    %984 = vmatpush1.msra.mxu0 %v983
    %985 = vmatprep.subr.mxu0 0.0
    %v986 = vand.u32 %v52, 4294901760
    %987 = vmatpush1.msra.mxu0 %v986
    %988 = vmatprep.subr.mxu0 0.0
    %v989 = vand.u32 %v53, 4294901760
    %990 = vmatpush1.msra.mxu0 %v989
    %991 = vmatprep.subr.mxu0 0.0
    %v992 = vand.u32 %v54, 4294901760
    %993 = vmatpush1.msra.mxu0 %v992
    %994 = vmatprep.subr.mxu0 0.0
    %v995 = vand.u32 %v55, 4294901760
    %996 = vmatpush1.msra.mxu0 %v995
    %997 = vmatprep.subr.mxu0 0.0
    %v998 = vand.u32 %v56, 4294901760
    %999 = vmatpush1.msra.mxu0 %v998
    %1000 = vmatprep.subr.mxu0 0.0
    %v1001 = vand.u32 %v57, 4294901760
    %1002 = vmatpush1.msra.mxu0 %v1001
    %1003 = vmatprep.subr.mxu0 0.0
    %v1004 = vand.u32 %v58, 4294901760
    %1005 = vmatpush1.msra.mxu0 %v1004
    %1006 = vmatprep.subr.mxu0 0.0
    %v1007 = vand.u32 %v59, 4294901760
    %1008 = vmatpush1.msra.mxu0 %v1007
    %1009 = vmatprep.subr.mxu0 0.0
    %v1010 = vand.u32 %v60, 4294901760
    %1011 = vmatpush1.msra.mxu0 %v1010
    %1012 = vmatprep.subr.mxu0 0.0
    %v1013 = vand.u32 %v61, 4294901760
    %1014 = vmatpush1.msra.mxu0 %v1013
    %1015 = vmatprep.subr.mxu0 0.0
    %v1016 = vand.u32 %v62, 4294901760
    %1017 = vmatpush1.msra.mxu0 %v1016
    %1018 = vmatprep.subr.mxu0 0.0
    %v1019 = vand.u32 %v63, 4294901760
    %1020 = vmatpush1.msra.mxu0 %v1019
    %1021 = vmatprep.subr.mxu0 0.0
    %v1022 = vand.u32 %v64, 4294901760
    %1023 = vmatpush1.msra.mxu0 %v1022
    %1024 = vmatprep.subr.mxu0 0.0
    %v1025 = vand.u32 %v65, 4294901760
    %1026 = vmatpush1.msra.mxu0 %v1025
    %1027 = vmatprep.subr.mxu0 0.0
    %v1028 = vand.u32 %v66, 4294901760
    %1029 = vmatpush1.msra.mxu0 %v1028
    %1030 = vmatprep.subr.mxu0 0.0
    %v1031 = vand.u32 %v67, 4294901760
    %1032 = vmatpush1.msra.mxu0 %v1031
    %1033 = vmatprep.subr.mxu0 0.0
    %v1034 = vand.u32 %v68, 4294901760
    %1035 = vmatpush1.msra.mxu0 %v1034
    %1036 = vmatprep.subr.mxu0 0.0
    %v1037 = vand.u32 %v69, 4294901760
    %1038 = vmatpush1.msra.mxu0 %v1037
    %1039 = vmatprep.subr.mxu0 0.0
    %v1040 = vand.u32 %v70, 4294901760
    %1041 = vmatpush1.msra.mxu0 %v1040
    %1042 = vmatprep.subr.mxu0 0.0
    %v1043 = vand.u32 %v71, 4294901760
    %1044 = vmatpush1.msra.mxu0 %v1043
    %1045 = vmatprep.subr.mxu0 0.0
    %v1046 = vand.u32 %v72, 4294901760
    %1047 = vmatpush1.msra.mxu0 %v1046
    %1048 = vmatprep.subr.mxu0 0.0
    %v1049 = vand.u32 %v73, 4294901760
    %1050 = vmatpush1.msra.mxu0 %v1049
    %1051 = vmatprep.subr.mxu0 0.0
    %v1052 = vand.u32 %v74, 4294901760
    %1053 = vmatpush1.msra.mxu0 %v1052
    %1054 = vmatprep.subr.mxu0 0.0
    %v1055 = vand.u32 %v75, 4294901760
    %1056 = vmatpush1.msra.mxu0 %v1055
    %1057 = vmatprep.subr.mxu0 0.0
    %v1058 = vand.u32 %v76, 4294901760
    %1059 = vmatpush1.msra.mxu0 %v1058
    %1060 = vmatprep.subr.mxu0 0.0
    %v1061 = vand.u32 %v77, 4294901760
    %1062 = vmatpush1.msra.mxu0 %v1061
    %1063 = vmatprep.subr.mxu0 0.0
    %v1064 = vand.u32 %v78, 4294901760
    %1065 = vmatpush1.msra.mxu0 %v1064
    %1066 = vmatprep.subr.mxu0 0.0
    %v1067 = vand.u32 %v79, 4294901760
    %1068 = vmatpush1.msra.mxu0 %v1067
    %1069 = vmatprep.subr.mxu0 0.0
    %v1070 = vand.u32 %v80, 4294901760
    %1071 = vmatpush1.msra.mxu0 %v1070
    %1072 = vmatprep.subr.mxu0 0.0
    %v1073 = vand.u32 %v81, 4294901760
    %1074 = vmatpush1.msra.mxu0 %v1073
    %v1075 = vand.u32 %v194, 4294901760
    %1076 = vmatprep.mubr.f32.mxu0 %v1075
    %v1077 = vand.u32 %v193, 4294901760
    %1078 = vmatmul.mubr.f32.gmra.mrb[0].mxu0 %v1077
    %v1079 = vpop.f32.mrb[0].mxu0
    %v1080 = vadd.f32 %v976, %v1079
    %v1081 = vpop.f32.mrb[0].mxu0
    %1082 = vdwg.mxu0
    %1083 = vmatprep.subr.mxu0 0.0
    %v1084 = vand.u32 %v82, 4294901760
    %1085 = vmatpush1.msra.mxu0 %v1084
    %1086 = vmatprep.subr.mxu0 0.0
    %v1087 = vand.u32 %v83, 4294901760
    %1088 = vmatpush1.msra.mxu0 %v1087
    %1089 = vmatprep.subr.mxu0 0.0
    %v1090 = vand.u32 %v84, 4294901760
    %1091 = vmatpush1.msra.mxu0 %v1090
    %1092 = vmatprep.subr.mxu0 0.0
    %v1093 = vand.u32 %v85, 4294901760
    %1094 = vmatpush1.msra.mxu0 %v1093
    %1095 = vmatprep.subr.mxu0 0.0
    %v1096 = vand.u32 %v86, 4294901760
    %1097 = vmatpush1.msra.mxu0 %v1096
    %1098 = vmatprep.subr.mxu0 0.0
    %v1099 = vand.u32 %v87, 4294901760
    %1100 = vmatpush1.msra.mxu0 %v1099
    %1101 = vmatprep.subr.mxu0 0.0
    %v1102 = vand.u32 %v88, 4294901760
    %1103 = vmatpush1.msra.mxu0 %v1102
    %1104 = vmatprep.subr.mxu0 0.0
    %v1105 = vand.u32 %v89, 4294901760
    %1106 = vmatpush1.msra.mxu0 %v1105
    %1107 = vmatprep.subr.mxu0 0.0
    %v1108 = vand.u32 %v90, 4294901760
    %1109 = vmatpush1.msra.mxu0 %v1108
    %1110 = vmatprep.subr.mxu0 0.0
    %v1111 = vand.u32 %v91, 4294901760
    %1112 = vmatpush1.msra.mxu0 %v1111
    %1113 = vmatprep.subr.mxu0 0.0
    %v1114 = vand.u32 %v92, 4294901760
    %1115 = vmatpush1.msra.mxu0 %v1114
    %1116 = vmatprep.subr.mxu0 0.0
    %v1117 = vand.u32 %v93, 4294901760
    %1118 = vmatpush1.msra.mxu0 %v1117
    %1119 = vmatprep.subr.mxu0 0.0
    %v1120 = vand.u32 %v94, 4294901760
    %1121 = vmatpush1.msra.mxu0 %v1120
    %1122 = vmatprep.subr.mxu0 0.0
    %v1123 = vand.u32 %v95, 4294901760
    %1124 = vmatpush1.msra.mxu0 %v1123
    %1125 = vmatprep.subr.mxu0 0.0
    %v1126 = vand.u32 %v96, 4294901760
    %1127 = vmatpush1.msra.mxu0 %v1126
    %1128 = vmatprep.subr.mxu0 0.0
    %v1129 = vand.u32 %v97, 4294901760
    %1130 = vmatpush1.msra.mxu0 %v1129
    %1131 = vmatprep.subr.mxu0 0.0
    %v1132 = vand.u32 %v98, 4294901760
    %1133 = vmatpush1.msra.mxu0 %v1132
    %1134 = vmatprep.subr.mxu0 0.0
    %v1135 = vand.u32 %v99, 4294901760
    %1136 = vmatpush1.msra.mxu0 %v1135
    %1137 = vmatprep.subr.mxu0 0.0
    %v1138 = vand.u32 %v100, 4294901760
    %1139 = vmatpush1.msra.mxu0 %v1138
    %1140 = vmatprep.subr.mxu0 0.0
    %v1141 = vand.u32 %v101, 4294901760
    %1142 = vmatpush1.msra.mxu0 %v1141
    %1143 = vmatprep.subr.mxu0 0.0
    %v1144 = vand.u32 %v102, 4294901760
    %1145 = vmatpush1.msra.mxu0 %v1144
    %1146 = vmatprep.subr.mxu0 0.0
    %v1147 = vand.u32 %v103, 4294901760
    %1148 = vmatpush1.msra.mxu0 %v1147
    %1149 = vmatprep.subr.mxu0 0.0
    %v1150 = vand.u32 %v104, 4294901760
    %1151 = vmatpush1.msra.mxu0 %v1150
    %1152 = vmatprep.subr.mxu0 0.0
    %v1153 = vand.u32 %v105, 4294901760
    %1154 = vmatpush1.msra.mxu0 %v1153
    %1155 = vmatprep.subr.mxu0 0.0
    %v1156 = vand.u32 %v106, 4294901760
    %1157 = vmatpush1.msra.mxu0 %v1156
    %1158 = vmatprep.subr.mxu0 0.0
    %v1159 = vand.u32 %v107, 4294901760
    %1160 = vmatpush1.msra.mxu0 %v1159
    %1161 = vmatprep.subr.mxu0 0.0
    %v1162 = vand.u32 %v108, 4294901760
    %1163 = vmatpush1.msra.mxu0 %v1162
    %1164 = vmatprep.subr.mxu0 0.0
    %v1165 = vand.u32 %v109, 4294901760
    %1166 = vmatpush1.msra.mxu0 %v1165
    %1167 = vmatprep.subr.mxu0 0.0
    %v1168 = vand.u32 %v110, 4294901760
    %1169 = vmatpush1.msra.mxu0 %v1168
    %1170 = vmatprep.subr.mxu0 0.0
    %v1171 = vand.u32 %v111, 4294901760
    %1172 = vmatpush1.msra.mxu0 %v1171
    %1173 = vmatprep.subr.mxu0 0.0
    %v1174 = vand.u32 %v112, 4294901760
    %1175 = vmatpush1.msra.mxu0 %v1174
    %1176 = vmatprep.subr.mxu0 0.0
    %v1177 = vand.u32 %v113, 4294901760
    %1178 = vmatpush1.msra.mxu0 %v1177
    %v1179 = vand.u32 %v196, 4294901760
    %v1180 = vsub.f32 %v196, %v1179
    %v1181 = vand.u32 %v1180, 4294901760
    %v1182 = vsub.f32 %v1180, %v1181
    %v1183 = vand.u32 %v1182, 4294901760
    %1184 = vmatprep.mubr.f32.mxu0 %v1183
    %v1185 = vand.u32 %v195, 4294901760
    %v1186 = vsub.f32 %v195, %v1185
    %v1187 = vand.u32 %v1186, 4294901760
    %v1188 = vsub.f32 %v1186, %v1187
    %v1189 = vand.u32 %v1188, 4294901760
    %1190 = vmatmul.mubr.f32.gmra.mrb[0].mxu0 %v1189
    %v1191 = vpop.f32.mrb[0].mxu0
    %v1192 = vadd.f32 %v1080, %v1191
    %v1193 = vpop.f32.mrb[0].mxu0
    %1194 = vdwg.mxu0
    %1195 = vmatprep.subr.mxu0 0.0
    %v1196 = vand.u32 %v82, 4294901760
    %v1197 = vsub.f32 %v82, %v1196
    %v1198 = vand.u32 %v1197, 4294901760
    %v1199 = vsub.f32 %v1197, %v1198
    %v1200 = vand.u32 %v1199, 4294901760
    %1201 = vmatpush1.msra.mxu0 %v1200
    %1202 = vmatprep.subr.mxu0 0.0
    %v1203 = vand.u32 %v83, 4294901760
    %v1204 = vsub.f32 %v83, %v1203
    %v1205 = vand.u32 %v1204, 4294901760
    %v1206 = vsub.f32 %v1204, %v1205
    %v1207 = vand.u32 %v1206, 4294901760
    %1208 = vmatpush1.msra.mxu0 %v1207
    %1209 = vmatprep.subr.mxu0 0.0
    %v1210 = vand.u32 %v84, 4294901760
    %v1211 = vsub.f32 %v84, %v1210
    %v1212 = vand.u32 %v1211, 4294901760
    %v1213 = vsub.f32 %v1211, %v1212
    %v1214 = vand.u32 %v1213, 4294901760
    %1215 = vmatpush1.msra.mxu0 %v1214
    %1216 = vmatprep.subr.mxu0 0.0
    %v1217 = vand.u32 %v85, 4294901760
    %v1218 = vsub.f32 %v85, %v1217
    %v1219 = vand.u32 %v1218, 4294901760
    %v1220 = vsub.f32 %v1218, %v1219
    %v1221 = vand.u32 %v1220, 4294901760
    %1222 = vmatpush1.msra.mxu0 %v1221
    %1223 = vmatprep.subr.mxu0 0.0
    %v1224 = vand.u32 %v86, 4294901760
    %v1225 = vsub.f32 %v86, %v1224
    %v1226 = vand.u32 %v1225, 4294901760
    %v1227 = vsub.f32 %v1225, %v1226
    %v1228 = vand.u32 %v1227, 4294901760
    %1229 = vmatpush1.msra.mxu0 %v1228
    %1230 = vmatprep.subr.mxu0 0.0
    %v1231 = vand.u32 %v87, 4294901760
    %v1232 = vsub.f32 %v87, %v1231
    %v1233 = vand.u32 %v1232, 4294901760
    %v1234 = vsub.f32 %v1232, %v1233
    %v1235 = vand.u32 %v1234, 4294901760
    %1236 = vmatpush1.msra.mxu0 %v1235
    %1237 = vmatprep.subr.mxu0 0.0
    %v1238 = vand.u32 %v88, 4294901760
    %v1239 = vsub.f32 %v88, %v1238
    %v1240 = vand.u32 %v1239, 4294901760
    %v1241 = vsub.f32 %v1239, %v1240
    %v1242 = vand.u32 %v1241, 4294901760
    %1243 = vmatpush1.msra.mxu0 %v1242
    %1244 = vmatprep.subr.mxu0 0.0
    %v1245 = vand.u32 %v89, 4294901760
    %v1246 = vsub.f32 %v89, %v1245
    %v1247 = vand.u32 %v1246, 4294901760
    %v1248 = vsub.f32 %v1246, %v1247
    %v1249 = vand.u32 %v1248, 4294901760
    %1250 = vmatpush1.msra.mxu0 %v1249
    %1251 = vmatprep.subr.mxu0 0.0
    %v1252 = vand.u32 %v90, 4294901760
    %v1253 = vsub.f32 %v90, %v1252
    %v1254 = vand.u32 %v1253, 4294901760
    %v1255 = vsub.f32 %v1253, %v1254
    %v1256 = vand.u32 %v1255, 4294901760
    %1257 = vmatpush1.msra.mxu0 %v1256
    %1258 = vmatprep.subr.mxu0 0.0
    %v1259 = vand.u32 %v91, 4294901760
    %v1260 = vsub.f32 %v91, %v1259
    %v1261 = vand.u32 %v1260, 4294901760
    %v1262 = vsub.f32 %v1260, %v1261
    %v1263 = vand.u32 %v1262, 4294901760
    %1264 = vmatpush1.msra.mxu0 %v1263
    %1265 = vmatprep.subr.mxu0 0.0
    %v1266 = vand.u32 %v92, 4294901760
    %v1267 = vsub.f32 %v92, %v1266
    %v1268 = vand.u32 %v1267, 4294901760
    %v1269 = vsub.f32 %v1267, %v1268
    %v1270 = vand.u32 %v1269, 4294901760
    %1271 = vmatpush1.msra.mxu0 %v1270
    %1272 = vmatprep.subr.mxu0 0.0
    %v1273 = vand.u32 %v93, 4294901760
    %v1274 = vsub.f32 %v93, %v1273
    %v1275 = vand.u32 %v1274, 4294901760
    %v1276 = vsub.f32 %v1274, %v1275
    %v1277 = vand.u32 %v1276, 4294901760
    %1278 = vmatpush1.msra.mxu0 %v1277
    %1279 = vmatprep.subr.mxu0 0.0
    %v1280 = vand.u32 %v94, 4294901760
    %v1281 = vsub.f32 %v94, %v1280
    %v1282 = vand.u32 %v1281, 4294901760
    %v1283 = vsub.f32 %v1281, %v1282
    %v1284 = vand.u32 %v1283, 4294901760
    %1285 = vmatpush1.msra.mxu0 %v1284
    %1286 = vmatprep.subr.mxu0 0.0
    %v1287 = vand.u32 %v95, 4294901760
    %v1288 = vsub.f32 %v95, %v1287
    %v1289 = vand.u32 %v1288, 4294901760
    %v1290 = vsub.f32 %v1288, %v1289
    %v1291 = vand.u32 %v1290, 4294901760
    %1292 = vmatpush1.msra.mxu0 %v1291
    %1293 = vmatprep.subr.mxu0 0.0
    %v1294 = vand.u32 %v96, 4294901760
    %v1295 = vsub.f32 %v96, %v1294
    %v1296 = vand.u32 %v1295, 4294901760
    %v1297 = vsub.f32 %v1295, %v1296
    %v1298 = vand.u32 %v1297, 4294901760
    %1299 = vmatpush1.msra.mxu0 %v1298
    %1300 = vmatprep.subr.mxu0 0.0
    %v1301 = vand.u32 %v97, 4294901760
    %v1302 = vsub.f32 %v97, %v1301
    %v1303 = vand.u32 %v1302, 4294901760
    %v1304 = vsub.f32 %v1302, %v1303
    %v1305 = vand.u32 %v1304, 4294901760
    %1306 = vmatpush1.msra.mxu0 %v1305
    %1307 = vmatprep.subr.mxu0 0.0
    %v1308 = vand.u32 %v98, 4294901760
    %v1309 = vsub.f32 %v98, %v1308
    %v1310 = vand.u32 %v1309, 4294901760
    %v1311 = vsub.f32 %v1309, %v1310
    %v1312 = vand.u32 %v1311, 4294901760
    %1313 = vmatpush1.msra.mxu0 %v1312
    %1314 = vmatprep.subr.mxu0 0.0
    %v1315 = vand.u32 %v99, 4294901760
    %v1316 = vsub.f32 %v99, %v1315
    %v1317 = vand.u32 %v1316, 4294901760
    %v1318 = vsub.f32 %v1316, %v1317
    %v1319 = vand.u32 %v1318, 4294901760
    %1320 = vmatpush1.msra.mxu0 %v1319
    %1321 = vmatprep.subr.mxu0 0.0
    %v1322 = vand.u32 %v100, 4294901760
    %v1323 = vsub.f32 %v100, %v1322
    %v1324 = vand.u32 %v1323, 4294901760
    %v1325 = vsub.f32 %v1323, %v1324
    %v1326 = vand.u32 %v1325, 4294901760
    %1327 = vmatpush1.msra.mxu0 %v1326
    %1328 = vmatprep.subr.mxu0 0.0
    %v1329 = vand.u32 %v101, 4294901760
    %v1330 = vsub.f32 %v101, %v1329
    %v1331 = vand.u32 %v1330, 4294901760
    %v1332 = vsub.f32 %v1330, %v1331
    %v1333 = vand.u32 %v1332, 4294901760
    %1334 = vmatpush1.msra.mxu0 %v1333
    %1335 = vmatprep.subr.mxu0 0.0
    %v1336 = vand.u32 %v102, 4294901760
    %v1337 = vsub.f32 %v102, %v1336
    %v1338 = vand.u32 %v1337, 4294901760
    %v1339 = vsub.f32 %v1337, %v1338
    %v1340 = vand.u32 %v1339, 4294901760
    %1341 = vmatpush1.msra.mxu0 %v1340
    %1342 = vmatprep.subr.mxu0 0.0
    %v1343 = vand.u32 %v103, 4294901760
    %v1344 = vsub.f32 %v103, %v1343
    %v1345 = vand.u32 %v1344, 4294901760
    %v1346 = vsub.f32 %v1344, %v1345
    %v1347 = vand.u32 %v1346, 4294901760
    %1348 = vmatpush1.msra.mxu0 %v1347
    %1349 = vmatprep.subr.mxu0 0.0
    %v1350 = vand.u32 %v104, 4294901760
    %v1351 = vsub.f32 %v104, %v1350
    %v1352 = vand.u32 %v1351, 4294901760
    %v1353 = vsub.f32 %v1351, %v1352
    %v1354 = vand.u32 %v1353, 4294901760
    %1355 = vmatpush1.msra.mxu0 %v1354
    %1356 = vmatprep.subr.mxu0 0.0
    %v1357 = vand.u32 %v105, 4294901760
    %v1358 = vsub.f32 %v105, %v1357
    %v1359 = vand.u32 %v1358, 4294901760
    %v1360 = vsub.f32 %v1358, %v1359
    %v1361 = vand.u32 %v1360, 4294901760
    %1362 = vmatpush1.msra.mxu0 %v1361
    %1363 = vmatprep.subr.mxu0 0.0
    %v1364 = vand.u32 %v106, 4294901760
    %v1365 = vsub.f32 %v106, %v1364
    %v1366 = vand.u32 %v1365, 4294901760
    %v1367 = vsub.f32 %v1365, %v1366
    %v1368 = vand.u32 %v1367, 4294901760
    %1369 = vmatpush1.msra.mxu0 %v1368
    %1370 = vmatprep.subr.mxu0 0.0
    %v1371 = vand.u32 %v107, 4294901760
    %v1372 = vsub.f32 %v107, %v1371
    %v1373 = vand.u32 %v1372, 4294901760
    %v1374 = vsub.f32 %v1372, %v1373
    %v1375 = vand.u32 %v1374, 4294901760
    %1376 = vmatpush1.msra.mxu0 %v1375
    %1377 = vmatprep.subr.mxu0 0.0
    %v1378 = vand.u32 %v108, 4294901760
    %v1379 = vsub.f32 %v108, %v1378
    %v1380 = vand.u32 %v1379, 4294901760
    %v1381 = vsub.f32 %v1379, %v1380
    %v1382 = vand.u32 %v1381, 4294901760
    %1383 = vmatpush1.msra.mxu0 %v1382
    %1384 = vmatprep.subr.mxu0 0.0
    %v1385 = vand.u32 %v109, 4294901760
    %v1386 = vsub.f32 %v109, %v1385
    %v1387 = vand.u32 %v1386, 4294901760
    %v1388 = vsub.f32 %v1386, %v1387
    %v1389 = vand.u32 %v1388, 4294901760
    %1390 = vmatpush1.msra.mxu0 %v1389
    %1391 = vmatprep.subr.mxu0 0.0
    %v1392 = vand.u32 %v110, 4294901760
    %v1393 = vsub.f32 %v110, %v1392
    %v1394 = vand.u32 %v1393, 4294901760
    %v1395 = vsub.f32 %v1393, %v1394
    %v1396 = vand.u32 %v1395, 4294901760
    %1397 = vmatpush1.msra.mxu0 %v1396
    %1398 = vmatprep.subr.mxu0 0.0
    %v1399 = vand.u32 %v111, 4294901760
    %v1400 = vsub.f32 %v111, %v1399
    %v1401 = vand.u32 %v1400, 4294901760
    %v1402 = vsub.f32 %v1400, %v1401
    %v1403 = vand.u32 %v1402, 4294901760
    %1404 = vmatpush1.msra.mxu0 %v1403
    %1405 = vmatprep.subr.mxu0 0.0
    %v1406 = vand.u32 %v112, 4294901760
    %v1407 = vsub.f32 %v112, %v1406
    %v1408 = vand.u32 %v1407, 4294901760
    %v1409 = vsub.f32 %v1407, %v1408
    %v1410 = vand.u32 %v1409, 4294901760
    %1411 = vmatpush1.msra.mxu0 %v1410
    %1412 = vmatprep.subr.mxu0 0.0
    %v1413 = vand.u32 %v113, 4294901760
    %v1414 = vsub.f32 %v113, %v1413
    %v1415 = vand.u32 %v1414, 4294901760
    %v1416 = vsub.f32 %v1414, %v1415
    %v1417 = vand.u32 %v1416, 4294901760
    %1418 = vmatpush1.msra.mxu0 %v1417
    %v1419 = vand.u32 %v196, 4294901760
    %1420 = vmatprep.mubr.f32.mxu0 %v1419
    %v1421 = vand.u32 %v195, 4294901760
    %1422 = vmatmul.mubr.f32.gmra.mrb[0].mxu0 %v1421
    %v1423 = vpop.f32.mrb[0].mxu0
    %v1424 = vadd.f32 %v1192, %v1423
    %v1425 = vpop.f32.mrb[0].mxu0
    %1426 = vdwg.mxu0
    %1427 = vmatprep.subr.mxu0 0.0
    %v1428 = vand.u32 %v82, 4294901760
    %v1429 = vsub.f32 %v82, %v1428
    %1430 = vmatpush1.msra.mxu0 %v1429
    %1431 = vmatprep.subr.mxu0 0.0
    %v1432 = vand.u32 %v83, 4294901760
    %v1433 = vsub.f32 %v83, %v1432
    %1434 = vmatpush1.msra.mxu0 %v1433
    %1435 = vmatprep.subr.mxu0 0.0
    %v1436 = vand.u32 %v84, 4294901760
    %v1437 = vsub.f32 %v84, %v1436
    %1438 = vmatpush1.msra.mxu0 %v1437
    %1439 = vmatprep.subr.mxu0 0.0
    %v1440 = vand.u32 %v85, 4294901760
    %v1441 = vsub.f32 %v85, %v1440
    %1442 = vmatpush1.msra.mxu0 %v1441
    %1443 = vmatprep.subr.mxu0 0.0
    %v1444 = vand.u32 %v86, 4294901760
    %v1445 = vsub.f32 %v86, %v1444
    %1446 = vmatpush1.msra.mxu0 %v1445
    %1447 = vmatprep.subr.mxu0 0.0
    %v1448 = vand.u32 %v87, 4294901760
    %v1449 = vsub.f32 %v87, %v1448
    %1450 = vmatpush1.msra.mxu0 %v1449
    %1451 = vmatprep.subr.mxu0 0.0
    %v1452 = vand.u32 %v88, 4294901760
    %v1453 = vsub.f32 %v88, %v1452
    %1454 = vmatpush1.msra.mxu0 %v1453
    %1455 = vmatprep.subr.mxu0 0.0
    %v1456 = vand.u32 %v89, 4294901760
    %v1457 = vsub.f32 %v89, %v1456
    %1458 = vmatpush1.msra.mxu0 %v1457
    %1459 = vmatprep.subr.mxu0 0.0
    %v1460 = vand.u32 %v90, 4294901760
    %v1461 = vsub.f32 %v90, %v1460
    %1462 = vmatpush1.msra.mxu0 %v1461
    %1463 = vmatprep.subr.mxu0 0.0
    %v1464 = vand.u32 %v91, 4294901760
    %v1465 = vsub.f32 %v91, %v1464
    %1466 = vmatpush1.msra.mxu0 %v1465
    %1467 = vmatprep.subr.mxu0 0.0
    %v1468 = vand.u32 %v92, 4294901760
    %v1469 = vsub.f32 %v92, %v1468
    %1470 = vmatpush1.msra.mxu0 %v1469
    %1471 = vmatprep.subr.mxu0 0.0
    %v1472 = vand.u32 %v93, 4294901760
    %v1473 = vsub.f32 %v93, %v1472
    %1474 = vmatpush1.msra.mxu0 %v1473
    %1475 = vmatprep.subr.mxu0 0.0
    %v1476 = vand.u32 %v94, 4294901760
    %v1477 = vsub.f32 %v94, %v1476
    %1478 = vmatpush1.msra.mxu0 %v1477
    %1479 = vmatprep.subr.mxu0 0.0
    %v1480 = vand.u32 %v95, 4294901760
    %v1481 = vsub.f32 %v95, %v1480
    %1482 = vmatpush1.msra.mxu0 %v1481
    %1483 = vmatprep.subr.mxu0 0.0
    %v1484 = vand.u32 %v96, 4294901760
    %v1485 = vsub.f32 %v96, %v1484
    %1486 = vmatpush1.msra.mxu0 %v1485
    %1487 = vmatprep.subr.mxu0 0.0
    %v1488 = vand.u32 %v97, 4294901760
    %v1489 = vsub.f32 %v97, %v1488
    %1490 = vmatpush1.msra.mxu0 %v1489
    %1491 = vmatprep.subr.mxu0 0.0
    %v1492 = vand.u32 %v98, 4294901760
    %v1493 = vsub.f32 %v98, %v1492
    %1494 = vmatpush1.msra.mxu0 %v1493
    %1495 = vmatprep.subr.mxu0 0.0
    %v1496 = vand.u32 %v99, 4294901760
    %v1497 = vsub.f32 %v99, %v1496
    %1498 = vmatpush1.msra.mxu0 %v1497
    %1499 = vmatprep.subr.mxu0 0.0
    %v1500 = vand.u32 %v100, 4294901760
    %v1501 = vsub.f32 %v100, %v1500
    %1502 = vmatpush1.msra.mxu0 %v1501
    %1503 = vmatprep.subr.mxu0 0.0
    %v1504 = vand.u32 %v101, 4294901760
    %v1505 = vsub.f32 %v101, %v1504
    %1506 = vmatpush1.msra.mxu0 %v1505
    %1507 = vmatprep.subr.mxu0 0.0
    %v1508 = vand.u32 %v102, 4294901760
    %v1509 = vsub.f32 %v102, %v1508
    %1510 = vmatpush1.msra.mxu0 %v1509
    %1511 = vmatprep.subr.mxu0 0.0
    %v1512 = vand.u32 %v103, 4294901760
    %v1513 = vsub.f32 %v103, %v1512
    %1514 = vmatpush1.msra.mxu0 %v1513
    %1515 = vmatprep.subr.mxu0 0.0
    %v1516 = vand.u32 %v104, 4294901760
    %v1517 = vsub.f32 %v104, %v1516
    %1518 = vmatpush1.msra.mxu0 %v1517
    %1519 = vmatprep.subr.mxu0 0.0
    %v1520 = vand.u32 %v105, 4294901760
    %v1521 = vsub.f32 %v105, %v1520
    %1522 = vmatpush1.msra.mxu0 %v1521
    %1523 = vmatprep.subr.mxu0 0.0
    %v1524 = vand.u32 %v106, 4294901760
    %v1525 = vsub.f32 %v106, %v1524
    %1526 = vmatpush1.msra.mxu0 %v1525
    %1527 = vmatprep.subr.mxu0 0.0
    %v1528 = vand.u32 %v107, 4294901760
    %v1529 = vsub.f32 %v107, %v1528
    %1530 = vmatpush1.msra.mxu0 %v1529
    %1531 = vmatprep.subr.mxu0 0.0
    %v1532 = vand.u32 %v108, 4294901760
    %v1533 = vsub.f32 %v108, %v1532
    %1534 = vmatpush1.msra.mxu0 %v1533
    %1535 = vmatprep.subr.mxu0 0.0
    %v1536 = vand.u32 %v109, 4294901760
    %v1537 = vsub.f32 %v109, %v1536
    %1538 = vmatpush1.msra.mxu0 %v1537
    %1539 = vmatprep.subr.mxu0 0.0
    %v1540 = vand.u32 %v110, 4294901760
    %v1541 = vsub.f32 %v110, %v1540
    %1542 = vmatpush1.msra.mxu0 %v1541
    %1543 = vmatprep.subr.mxu0 0.0
    %v1544 = vand.u32 %v111, 4294901760
    %v1545 = vsub.f32 %v111, %v1544
    %1546 = vmatpush1.msra.mxu0 %v1545
    %1547 = vmatprep.subr.mxu0 0.0
    %v1548 = vand.u32 %v112, 4294901760
    %v1549 = vsub.f32 %v112, %v1548
    %1550 = vmatpush1.msra.mxu0 %v1549
    %1551 = vmatprep.subr.mxu0 0.0
    %v1552 = vand.u32 %v113, 4294901760
    %v1553 = vsub.f32 %v113, %v1552
    %1554 = vmatpush1.msra.mxu0 %v1553
    %v1555 = vand.u32 %v196, 4294901760
    %v1556 = vsub.f32 %v196, %v1555
    %1557 = vmatprep.mubr.f32.mxu0 %v1556
    %v1558 = vand.u32 %v195, 4294901760
    %v1559 = vsub.f32 %v195, %v1558
    %1560 = vmatmul.mubr.f32.gmra.mrb[0].mxu0 %v1559
    %v1561 = vpop.f32.mrb[0].mxu0
    %v1562 = vadd.f32 %v1424, %v1561
    %v1563 = vpop.f32.mrb[0].mxu0
    %1564 = vdwg.mxu0
    %1565 = vmatprep.subr.mxu0 0.0
    %v1566 = vand.u32 %v82, 4294901760
    %1567 = vmatpush1.msra.mxu0 %v1566
    %1568 = vmatprep.subr.mxu0 0.0
    %v1569 = vand.u32 %v83, 4294901760
    %1570 = vmatpush1.msra.mxu0 %v1569
    %1571 = vmatprep.subr.mxu0 0.0
    %v1572 = vand.u32 %v84, 4294901760
    %1573 = vmatpush1.msra.mxu0 %v1572
    %1574 = vmatprep.subr.mxu0 0.0
    %v1575 = vand.u32 %v85, 4294901760
    %1576 = vmatpush1.msra.mxu0 %v1575
    %1577 = vmatprep.subr.mxu0 0.0
    %v1578 = vand.u32 %v86, 4294901760
    %1579 = vmatpush1.msra.mxu0 %v1578
    %1580 = vmatprep.subr.mxu0 0.0
    %v1581 = vand.u32 %v87, 4294901760
    %1582 = vmatpush1.msra.mxu0 %v1581
    %1583 = vmatprep.subr.mxu0 0.0
    %v1584 = vand.u32 %v88, 4294901760
    %1585 = vmatpush1.msra.mxu0 %v1584
    %1586 = vmatprep.subr.mxu0 0.0
    %v1587 = vand.u32 %v89, 4294901760
    %1588 = vmatpush1.msra.mxu0 %v1587
    %1589 = vmatprep.subr.mxu0 0.0
    %v1590 = vand.u32 %v90, 4294901760
    %1591 = vmatpush1.msra.mxu0 %v1590
    %1592 = vmatprep.subr.mxu0 0.0
    %v1593 = vand.u32 %v91, 4294901760
    %1594 = vmatpush1.msra.mxu0 %v1593
    %1595 = vmatprep.subr.mxu0 0.0
    %v1596 = vand.u32 %v92, 4294901760
    %1597 = vmatpush1.msra.mxu0 %v1596
    %1598 = vmatprep.subr.mxu0 0.0
    %v1599 = vand.u32 %v93, 4294901760
    %1600 = vmatpush1.msra.mxu0 %v1599
    %1601 = vmatprep.subr.mxu0 0.0
    %v1602 = vand.u32 %v94, 4294901760
    %1603 = vmatpush1.msra.mxu0 %v1602
    %1604 = vmatprep.subr.mxu0 0.0
    %v1605 = vand.u32 %v95, 4294901760
    %1606 = vmatpush1.msra.mxu0 %v1605
    %1607 = vmatprep.subr.mxu0 0.0
    %v1608 = vand.u32 %v96, 4294901760
    %1609 = vmatpush1.msra.mxu0 %v1608
    %1610 = vmatprep.subr.mxu0 0.0
    %v1611 = vand.u32 %v97, 4294901760
    %1612 = vmatpush1.msra.mxu0 %v1611
    %1613 = vmatprep.subr.mxu0 0.0
    %v1614 = vand.u32 %v98, 4294901760
    %1615 = vmatpush1.msra.mxu0 %v1614
    %1616 = vmatprep.subr.mxu0 0.0
    %v1617 = vand.u32 %v99, 4294901760
    %1618 = vmatpush1.msra.mxu0 %v1617
    %1619 = vmatprep.subr.mxu0 0.0
    %v1620 = vand.u32 %v100, 4294901760
    %1621 = vmatpush1.msra.mxu0 %v1620
    %1622 = vmatprep.subr.mxu0 0.0
    %v1623 = vand.u32 %v101, 4294901760
    %1624 = vmatpush1.msra.mxu0 %v1623
    %1625 = vmatprep.subr.mxu0 0.0
    %v1626 = vand.u32 %v102, 4294901760
    %1627 = vmatpush1.msra.mxu0 %v1626
    %1628 = vmatprep.subr.mxu0 0.0
    %v1629 = vand.u32 %v103, 4294901760
    %1630 = vmatpush1.msra.mxu0 %v1629
    %1631 = vmatprep.subr.mxu0 0.0
    %v1632 = vand.u32 %v104, 4294901760
    %1633 = vmatpush1.msra.mxu0 %v1632
    %1634 = vmatprep.subr.mxu0 0.0
    %v1635 = vand.u32 %v105, 4294901760
    %1636 = vmatpush1.msra.mxu0 %v1635
    %1637 = vmatprep.subr.mxu0 0.0
    %v1638 = vand.u32 %v106, 4294901760
    %1639 = vmatpush1.msra.mxu0 %v1638
    %1640 = vmatprep.subr.mxu0 0.0
    %v1641 = vand.u32 %v107, 4294901760
    %1642 = vmatpush1.msra.mxu0 %v1641
    %1643 = vmatprep.subr.mxu0 0.0
    %v1644 = vand.u32 %v108, 4294901760
    %1645 = vmatpush1.msra.mxu0 %v1644
    %1646 = vmatprep.subr.mxu0 0.0
    %v1647 = vand.u32 %v109, 4294901760
    %1648 = vmatpush1.msra.mxu0 %v1647
    %1649 = vmatprep.subr.mxu0 0.0
    %v1650 = vand.u32 %v110, 4294901760
    %1651 = vmatpush1.msra.mxu0 %v1650
    %1652 = vmatprep.subr.mxu0 0.0
    %v1653 = vand.u32 %v111, 4294901760
    %1654 = vmatpush1.msra.mxu0 %v1653
    %1655 = vmatprep.subr.mxu0 0.0
    %v1656 = vand.u32 %v112, 4294901760
    %1657 = vmatpush1.msra.mxu0 %v1656
    %1658 = vmatprep.subr.mxu0 0.0
    %v1659 = vand.u32 %v113, 4294901760
    %1660 = vmatpush1.msra.mxu0 %v1659
    %v1661 = vand.u32 %v196, 4294901760
    %v1662 = vsub.f32 %v196, %v1661
    %v1663 = vand.u32 %v1662, 4294901760
    %1664 = vmatprep.mubr.f32.mxu0 %v1663
    %v1665 = vand.u32 %v195, 4294901760
    %v1666 = vsub.f32 %v195, %v1665
    %v1667 = vand.u32 %v1666, 4294901760
    %1668 = vmatmul.mubr.f32.gmra.mrb[0].mxu0 %v1667
    %v1669 = vpop.f32.mrb[0].mxu0
    %v1670 = vadd.f32 %v1562, %v1669
    %v1671 = vpop.f32.mrb[0].mxu0
    %1672 = vdwg.mxu0
    %1673 = vmatprep.subr.mxu0 0.0
    %v1674 = vand.u32 %v82, 4294901760
    %v1675 = vsub.f32 %v82, %v1674
    %v1676 = vand.u32 %v1675, 4294901760
    %1677 = vmatpush1.msra.mxu0 %v1676
    %1678 = vmatprep.subr.mxu0 0.0
    %v1679 = vand.u32 %v83, 4294901760
    %v1680 = vsub.f32 %v83, %v1679
    %v1681 = vand.u32 %v1680, 4294901760
    %1682 = vmatpush1.msra.mxu0 %v1681
    %1683 = vmatprep.subr.mxu0 0.0
    %v1684 = vand.u32 %v84, 4294901760
    %v1685 = vsub.f32 %v84, %v1684
    %v1686 = vand.u32 %v1685, 4294901760
    %1687 = vmatpush1.msra.mxu0 %v1686
    %1688 = vmatprep.subr.mxu0 0.0
    %v1689 = vand.u32 %v85, 4294901760
    %v1690 = vsub.f32 %v85, %v1689
    %v1691 = vand.u32 %v1690, 4294901760
    %1692 = vmatpush1.msra.mxu0 %v1691
    %1693 = vmatprep.subr.mxu0 0.0
    %v1694 = vand.u32 %v86, 4294901760
    %v1695 = vsub.f32 %v86, %v1694
    %v1696 = vand.u32 %v1695, 4294901760
    %1697 = vmatpush1.msra.mxu0 %v1696
    %1698 = vmatprep.subr.mxu0 0.0
    %v1699 = vand.u32 %v87, 4294901760
    %v1700 = vsub.f32 %v87, %v1699
    %v1701 = vand.u32 %v1700, 4294901760
    %1702 = vmatpush1.msra.mxu0 %v1701
    %1703 = vmatprep.subr.mxu0 0.0
    %v1704 = vand.u32 %v88, 4294901760
    %v1705 = vsub.f32 %v88, %v1704
    %v1706 = vand.u32 %v1705, 4294901760
    %1707 = vmatpush1.msra.mxu0 %v1706
    %1708 = vmatprep.subr.mxu0 0.0
    %v1709 = vand.u32 %v89, 4294901760
    %v1710 = vsub.f32 %v89, %v1709
    %v1711 = vand.u32 %v1710, 4294901760
    %1712 = vmatpush1.msra.mxu0 %v1711
    %1713 = vmatprep.subr.mxu0 0.0
    %v1714 = vand.u32 %v90, 4294901760
    %v1715 = vsub.f32 %v90, %v1714
    %v1716 = vand.u32 %v1715, 4294901760
    %1717 = vmatpush1.msra.mxu0 %v1716
    %1718 = vmatprep.subr.mxu0 0.0
    %v1719 = vand.u32 %v91, 4294901760
    %v1720 = vsub.f32 %v91, %v1719
    %v1721 = vand.u32 %v1720, 4294901760
    %1722 = vmatpush1.msra.mxu0 %v1721
    %1723 = vmatprep.subr.mxu0 0.0
    %v1724 = vand.u32 %v92, 4294901760
    %v1725 = vsub.f32 %v92, %v1724
    %v1726 = vand.u32 %v1725, 4294901760
    %1727 = vmatpush1.msra.mxu0 %v1726
    %1728 = vmatprep.subr.mxu0 0.0
    %v1729 = vand.u32 %v93, 4294901760
    %v1730 = vsub.f32 %v93, %v1729
    %v1731 = vand.u32 %v1730, 4294901760
    %1732 = vmatpush1.msra.mxu0 %v1731
    %1733 = vmatprep.subr.mxu0 0.0
    %v1734 = vand.u32 %v94, 4294901760
    %v1735 = vsub.f32 %v94, %v1734
    %v1736 = vand.u32 %v1735, 4294901760
    %1737 = vmatpush1.msra.mxu0 %v1736
    %1738 = vmatprep.subr.mxu0 0.0
    %v1739 = vand.u32 %v95, 4294901760
    %v1740 = vsub.f32 %v95, %v1739
    %v1741 = vand.u32 %v1740, 4294901760
    %1742 = vmatpush1.msra.mxu0 %v1741
    %1743 = vmatprep.subr.mxu0 0.0
    %v1744 = vand.u32 %v96, 4294901760
    %v1745 = vsub.f32 %v96, %v1744
    %v1746 = vand.u32 %v1745, 4294901760
    %1747 = vmatpush1.msra.mxu0 %v1746
    %1748 = vmatprep.subr.mxu0 0.0
    %v1749 = vand.u32 %v97, 4294901760
    %v1750 = vsub.f32 %v97, %v1749
    %v1751 = vand.u32 %v1750, 4294901760
    %1752 = vmatpush1.msra.mxu0 %v1751
    %1753 = vmatprep.subr.mxu0 0.0
    %v1754 = vand.u32 %v98, 4294901760
    %v1755 = vsub.f32 %v98, %v1754
    %v1756 = vand.u32 %v1755, 4294901760
    %1757 = vmatpush1.msra.mxu0 %v1756
    %1758 = vmatprep.subr.mxu0 0.0
    %v1759 = vand.u32 %v99, 4294901760
    %v1760 = vsub.f32 %v99, %v1759
    %v1761 = vand.u32 %v1760, 4294901760
    %1762 = vmatpush1.msra.mxu0 %v1761
    %1763 = vmatprep.subr.mxu0 0.0
    %v1764 = vand.u32 %v100, 4294901760
    %v1765 = vsub.f32 %v100, %v1764
    %v1766 = vand.u32 %v1765, 4294901760
    %1767 = vmatpush1.msra.mxu0 %v1766
    %1768 = vmatprep.subr.mxu0 0.0
    %v1769 = vand.u32 %v101, 4294901760
    %v1770 = vsub.f32 %v101, %v1769
    %v1771 = vand.u32 %v1770, 4294901760
    %1772 = vmatpush1.msra.mxu0 %v1771
    %1773 = vmatprep.subr.mxu0 0.0
    %v1774 = vand.u32 %v102, 4294901760
    %v1775 = vsub.f32 %v102, %v1774
    %v1776 = vand.u32 %v1775, 4294901760
    %1777 = vmatpush1.msra.mxu0 %v1776
    %1778 = vmatprep.subr.mxu0 0.0
    %v1779 = vand.u32 %v103, 4294901760
    %v1780 = vsub.f32 %v103, %v1779
    %v1781 = vand.u32 %v1780, 4294901760
    %1782 = vmatpush1.msra.mxu0 %v1781
    %1783 = vmatprep.subr.mxu0 0.0
    %v1784 = vand.u32 %v104, 4294901760
    %v1785 = vsub.f32 %v104, %v1784
    %v1786 = vand.u32 %v1785, 4294901760
    %1787 = vmatpush1.msra.mxu0 %v1786
    %1788 = vmatprep.subr.mxu0 0.0
    %v1789 = vand.u32 %v105, 4294901760
    %v1790 = vsub.f32 %v105, %v1789
    %v1791 = vand.u32 %v1790, 4294901760
    %1792 = vmatpush1.msra.mxu0 %v1791
    %1793 = vmatprep.subr.mxu0 0.0
    %v1794 = vand.u32 %v106, 4294901760
    %v1795 = vsub.f32 %v106, %v1794
    %v1796 = vand.u32 %v1795, 4294901760
    %1797 = vmatpush1.msra.mxu0 %v1796
    %1798 = vmatprep.subr.mxu0 0.0
    %v1799 = vand.u32 %v107, 4294901760
    %v1800 = vsub.f32 %v107, %v1799
    %v1801 = vand.u32 %v1800, 4294901760
    %1802 = vmatpush1.msra.mxu0 %v1801
    %1803 = vmatprep.subr.mxu0 0.0
    %v1804 = vand.u32 %v108, 4294901760
    %v1805 = vsub.f32 %v108, %v1804
    %v1806 = vand.u32 %v1805, 4294901760
    %1807 = vmatpush1.msra.mxu0 %v1806
    %1808 = vmatprep.subr.mxu0 0.0
    %v1809 = vand.u32 %v109, 4294901760
    %v1810 = vsub.f32 %v109, %v1809
    %v1811 = vand.u32 %v1810, 4294901760
    %1812 = vmatpush1.msra.mxu0 %v1811
    %1813 = vmatprep.subr.mxu0 0.0
    %v1814 = vand.u32 %v110, 4294901760
    %v1815 = vsub.f32 %v110, %v1814
    %v1816 = vand.u32 %v1815, 4294901760
    %1817 = vmatpush1.msra.mxu0 %v1816
    %1818 = vmatprep.subr.mxu0 0.0
    %v1819 = vand.u32 %v111, 4294901760
    %v1820 = vsub.f32 %v111, %v1819
    %v1821 = vand.u32 %v1820, 4294901760
    %1822 = vmatpush1.msra.mxu0 %v1821
    %1823 = vmatprep.subr.mxu0 0.0
    %v1824 = vand.u32 %v112, 4294901760
    %v1825 = vsub.f32 %v112, %v1824
    %v1826 = vand.u32 %v1825, 4294901760
    %1827 = vmatpush1.msra.mxu0 %v1826
    %1828 = vmatprep.subr.mxu0 0.0
    %v1829 = vand.u32 %v113, 4294901760
    %v1830 = vsub.f32 %v113, %v1829
    %v1831 = vand.u32 %v1830, 4294901760
    %1832 = vmatpush1.msra.mxu0 %v1831
    %v1833 = vand.u32 %v196, 4294901760
    %1834 = vmatprep.mubr.f32.mxu0 %v1833
    %v1835 = vand.u32 %v195, 4294901760
    %1836 = vmatmul.mubr.f32.gmra.mrb[0].mxu0 %v1835
    %v1837 = vpop.f32.mrb[0].mxu0
    %v1838 = vadd.f32 %v1670, %v1837
    %v1839 = vpop.f32.mrb[0].mxu0
    %1840 = vdwg.mxu0
    %1841 = vmatprep.subr.mxu0 0.0
    %v1842 = vand.u32 %v82, 4294901760
    %1843 = vmatpush1.msra.mxu0 %v1842
    %1844 = vmatprep.subr.mxu0 0.0
    %v1845 = vand.u32 %v83, 4294901760
    %1846 = vmatpush1.msra.mxu0 %v1845
    %1847 = vmatprep.subr.mxu0 0.0
    %v1848 = vand.u32 %v84, 4294901760
    %1849 = vmatpush1.msra.mxu0 %v1848
    %1850 = vmatprep.subr.mxu0 0.0
    %v1851 = vand.u32 %v85, 4294901760
    %1852 = vmatpush1.msra.mxu0 %v1851
    %1853 = vmatprep.subr.mxu0 0.0
    %v1854 = vand.u32 %v86, 4294901760
    %1855 = vmatpush1.msra.mxu0 %v1854
    %1856 = vmatprep.subr.mxu0 0.0
    %v1857 = vand.u32 %v87, 4294901760
    %1858 = vmatpush1.msra.mxu0 %v1857
    %1859 = vmatprep.subr.mxu0 0.0
    %v1860 = vand.u32 %v88, 4294901760
    %1861 = vmatpush1.msra.mxu0 %v1860
    %1862 = vmatprep.subr.mxu0 0.0
    %v1863 = vand.u32 %v89, 4294901760
    %1864 = vmatpush1.msra.mxu0 %v1863
    %1865 = vmatprep.subr.mxu0 0.0
    %v1866 = vand.u32 %v90, 4294901760
    %1867 = vmatpush1.msra.mxu0 %v1866
    %1868 = vmatprep.subr.mxu0 0.0
    %v1869 = vand.u32 %v91, 4294901760
    %1870 = vmatpush1.msra.mxu0 %v1869
    %1871 = vmatprep.subr.mxu0 0.0
    %v1872 = vand.u32 %v92, 4294901760
    %1873 = vmatpush1.msra.mxu0 %v1872
    %1874 = vmatprep.subr.mxu0 0.0
    %v1875 = vand.u32 %v93, 4294901760
    %1876 = vmatpush1.msra.mxu0 %v1875
    %1877 = vmatprep.subr.mxu0 0.0
    %v1878 = vand.u32 %v94, 4294901760
    %1879 = vmatpush1.msra.mxu0 %v1878
    %1880 = vmatprep.subr.mxu0 0.0
    %v1881 = vand.u32 %v95, 4294901760
    %1882 = vmatpush1.msra.mxu0 %v1881
    %1883 = vmatprep.subr.mxu0 0.0
    %v1884 = vand.u32 %v96, 4294901760
    %1885 = vmatpush1.msra.mxu0 %v1884
    %1886 = vmatprep.subr.mxu0 0.0
    %v1887 = vand.u32 %v97, 4294901760
    %1888 = vmatpush1.msra.mxu0 %v1887
    %1889 = vmatprep.subr.mxu0 0.0
    %v1890 = vand.u32 %v98, 4294901760
    %1891 = vmatpush1.msra.mxu0 %v1890
    %1892 = vmatprep.subr.mxu0 0.0
    %v1893 = vand.u32 %v99, 4294901760
    %1894 = vmatpush1.msra.mxu0 %v1893
    %1895 = vmatprep.subr.mxu0 0.0
    %v1896 = vand.u32 %v100, 4294901760
    %1897 = vmatpush1.msra.mxu0 %v1896
    %1898 = vmatprep.subr.mxu0 0.0
    %v1899 = vand.u32 %v101, 4294901760
    %1900 = vmatpush1.msra.mxu0 %v1899
    %1901 = vmatprep.subr.mxu0 0.0
    %v1902 = vand.u32 %v102, 4294901760
    %1903 = vmatpush1.msra.mxu0 %v1902
    %1904 = vmatprep.subr.mxu0 0.0
    %v1905 = vand.u32 %v103, 4294901760
    %1906 = vmatpush1.msra.mxu0 %v1905
    %1907 = vmatprep.subr.mxu0 0.0
    %v1908 = vand.u32 %v104, 4294901760
    %1909 = vmatpush1.msra.mxu0 %v1908
    %1910 = vmatprep.subr.mxu0 0.0
    %v1911 = vand.u32 %v105, 4294901760
    %1912 = vmatpush1.msra.mxu0 %v1911
    %1913 = vmatprep.subr.mxu0 0.0
    %v1914 = vand.u32 %v106, 4294901760
    %1915 = vmatpush1.msra.mxu0 %v1914
    %1916 = vmatprep.subr.mxu0 0.0
    %v1917 = vand.u32 %v107, 4294901760
    %1918 = vmatpush1.msra.mxu0 %v1917
    %1919 = vmatprep.subr.mxu0 0.0
    %v1920 = vand.u32 %v108, 4294901760
    %1921 = vmatpush1.msra.mxu0 %v1920
    %1922 = vmatprep.subr.mxu0 0.0
    %v1923 = vand.u32 %v109, 4294901760
    %1924 = vmatpush1.msra.mxu0 %v1923
    %1925 = vmatprep.subr.mxu0 0.0
    %v1926 = vand.u32 %v110, 4294901760
    %1927 = vmatpush1.msra.mxu0 %v1926
    %1928 = vmatprep.subr.mxu0 0.0
    %v1929 = vand.u32 %v111, 4294901760
    %1930 = vmatpush1.msra.mxu0 %v1929
    %1931 = vmatprep.subr.mxu0 0.0
    %v1932 = vand.u32 %v112, 4294901760
    %1933 = vmatpush1.msra.mxu0 %v1932
    %1934 = vmatprep.subr.mxu0 0.0
    %v1935 = vand.u32 %v113, 4294901760
    %1936 = vmatpush1.msra.mxu0 %v1935
    %v1937 = vand.u32 %v196, 4294901760
    %1938 = vmatprep.mubr.f32.mxu0 %v1937
    %v1939 = vand.u32 %v195, 4294901760
    %1940 = vmatmul.mubr.f32.gmra.mrb[0].mxu0 %v1939
    %v1941 = vpop.f32.mrb[0].mxu0
    %v1942 = vadd.f32 %v1838, %v1941
    %v1943 = vpop.f32.mrb[0].mxu0
    %1944 = vdwg.mxu0
    %1945 = vmatprep.subr.mxu0 0.0
    %v1946 = vand.u32 %v114, 4294901760
    %1947 = vmatpush1.msra.mxu0 %v1946
    %1948 = vmatprep.subr.mxu0 0.0
    %v1949 = vand.u32 %v115, 4294901760
    %1950 = vmatpush1.msra.mxu0 %v1949
    %1951 = vmatprep.subr.mxu0 0.0
    %v1952 = vand.u32 %v116, 4294901760
    %1953 = vmatpush1.msra.mxu0 %v1952
    %1954 = vmatprep.subr.mxu0 0.0
    %v1955 = vand.u32 %v117, 4294901760
    %1956 = vmatpush1.msra.mxu0 %v1955
    %1957 = vmatprep.subr.mxu0 0.0
    %v1958 = vand.u32 %v118, 4294901760
    %1959 = vmatpush1.msra.mxu0 %v1958
    %1960 = vmatprep.subr.mxu0 0.0
    %v1961 = vand.u32 %v119, 4294901760
    %1962 = vmatpush1.msra.mxu0 %v1961
    %1963 = vmatprep.subr.mxu0 0.0
    %v1964 = vand.u32 %v120, 4294901760
    %1965 = vmatpush1.msra.mxu0 %v1964
    %1966 = vmatprep.subr.mxu0 0.0
    %v1967 = vand.u32 %v121, 4294901760
    %1968 = vmatpush1.msra.mxu0 %v1967
    %1969 = vmatprep.subr.mxu0 0.0
    %v1970 = vand.u32 %v122, 4294901760
    %1971 = vmatpush1.msra.mxu0 %v1970
    %1972 = vmatprep.subr.mxu0 0.0
    %v1973 = vand.u32 %v123, 4294901760
    %1974 = vmatpush1.msra.mxu0 %v1973
    %1975 = vmatprep.subr.mxu0 0.0
    %v1976 = vand.u32 %v124, 4294901760
    %1977 = vmatpush1.msra.mxu0 %v1976
    %1978 = vmatprep.subr.mxu0 0.0
    %v1979 = vand.u32 %v125, 4294901760
    %1980 = vmatpush1.msra.mxu0 %v1979
    %1981 = vmatprep.subr.mxu0 0.0
    %v1982 = vand.u32 %v126, 4294901760
    %1983 = vmatpush1.msra.mxu0 %v1982
    %1984 = vmatprep.subr.mxu0 0.0
    %v1985 = vand.u32 %v127, 4294901760
    %1986 = vmatpush1.msra.mxu0 %v1985
    %1987 = vmatprep.subr.mxu0 0.0
    %v1988 = vand.u32 %v128, 4294901760
    %1989 = vmatpush1.msra.mxu0 %v1988
    %1990 = vmatprep.subr.mxu0 0.0
    %v1991 = vand.u32 %v129, 4294901760
    %1992 = vmatpush1.msra.mxu0 %v1991
    %1993 = vmatprep.subr.mxu0 0.0
    %v1994 = vand.u32 %v130, 4294901760
    %1995 = vmatpush1.msra.mxu0 %v1994
    %1996 = vmatprep.subr.mxu0 0.0
    %v1997 = vand.u32 %v131, 4294901760
    %1998 = vmatpush1.msra.mxu0 %v1997
    %1999 = vmatprep.subr.mxu0 0.0
    %v2000 = vand.u32 %v132, 4294901760
    %2001 = vmatpush1.msra.mxu0 %v2000
    %2002 = vmatprep.subr.mxu0 0.0
    %v2003 = vand.u32 %v133, 4294901760
    %2004 = vmatpush1.msra.mxu0 %v2003
    %2005 = vmatprep.subr.mxu0 0.0
    %v2006 = vand.u32 %v134, 4294901760
    %2007 = vmatpush1.msra.mxu0 %v2006
    %2008 = vmatprep.subr.mxu0 0.0
    %v2009 = vand.u32 %v135, 4294901760
    %2010 = vmatpush1.msra.mxu0 %v2009
    %2011 = vmatprep.subr.mxu0 0.0
    %v2012 = vand.u32 %v136, 4294901760
    %2013 = vmatpush1.msra.mxu0 %v2012
    %2014 = vmatprep.subr.mxu0 0.0
    %v2015 = vand.u32 %v137, 4294901760
    %2016 = vmatpush1.msra.mxu0 %v2015
    %2017 = vmatprep.subr.mxu0 0.0
    %v2018 = vand.u32 %v138, 4294901760
    %2019 = vmatpush1.msra.mxu0 %v2018
    %2020 = vmatprep.subr.mxu0 0.0
    %v2021 = vand.u32 %v139, 4294901760
    %2022 = vmatpush1.msra.mxu0 %v2021
    %2023 = vmatprep.subr.mxu0 0.0
    %v2024 = vand.u32 %v140, 4294901760
    %2025 = vmatpush1.msra.mxu0 %v2024
    %2026 = vmatprep.subr.mxu0 0.0
    %v2027 = vand.u32 %v141, 4294901760
    %2028 = vmatpush1.msra.mxu0 %v2027
    %2029 = vmatprep.subr.mxu0 0.0
    %v2030 = vand.u32 %v142, 4294901760
    %2031 = vmatpush1.msra.mxu0 %v2030
    %2032 = vmatprep.subr.mxu0 0.0
    %v2033 = vand.u32 %v143, 4294901760
    %2034 = vmatpush1.msra.mxu0 %v2033
    %2035 = vmatprep.subr.mxu0 0.0
    %v2036 = vand.u32 %v144, 4294901760
    %2037 = vmatpush1.msra.mxu0 %v2036
    %2038 = vmatprep.subr.mxu0 0.0
    %v2039 = vand.u32 %v145, 4294901760
    %2040 = vmatpush1.msra.mxu0 %v2039
    %v2041 = vand.u32 %v214, 4294901760
    %v2042 = vsub.f32 %v214, %v2041
    %v2043 = vand.u32 %v2042, 4294901760
    %v2044 = vsub.f32 %v2042, %v2043
    %v2045 = vand.u32 %v2044, 4294901760
    %2046 = vmatprep.mubr.f32.mxu0 %v2045
    %v2047 = vand.u32 %v213, 4294901760
    %v2048 = vsub.f32 %v213, %v2047
    %v2049 = vand.u32 %v2048, 4294901760
    %v2050 = vsub.f32 %v2048, %v2049
    %v2051 = vand.u32 %v2050, 4294901760
    %2052 = vmatmul.mubr.f32.gmra.mrb[0].mxu0 %v2051
    %v2053 = vpop.f32.mrb[0].mxu0
    %v2054 = vadd.f32 %v1942, %v2053
    %v2055 = vpop.f32.mrb[0].mxu0
    %2056 = vdwg.mxu0
    %2057 = vmatprep.subr.mxu0 0.0
    %v2058 = vand.u32 %v114, 4294901760
    %v2059 = vsub.f32 %v114, %v2058
    %v2060 = vand.u32 %v2059, 4294901760
    %v2061 = vsub.f32 %v2059, %v2060
    %v2062 = vand.u32 %v2061, 4294901760
    %2063 = vmatpush1.msra.mxu0 %v2062
    %2064 = vmatprep.subr.mxu0 0.0
    %v2065 = vand.u32 %v115, 4294901760
    %v2066 = vsub.f32 %v115, %v2065
    %v2067 = vand.u32 %v2066, 4294901760
    %v2068 = vsub.f32 %v2066, %v2067
    %v2069 = vand.u32 %v2068, 4294901760
    %2070 = vmatpush1.msra.mxu0 %v2069
    %2071 = vmatprep.subr.mxu0 0.0
    %v2072 = vand.u32 %v116, 4294901760
    %v2073 = vsub.f32 %v116, %v2072
    %v2074 = vand.u32 %v2073, 4294901760
    %v2075 = vsub.f32 %v2073, %v2074
    %v2076 = vand.u32 %v2075, 4294901760
    %2077 = vmatpush1.msra.mxu0 %v2076
    %2078 = vmatprep.subr.mxu0 0.0
    %v2079 = vand.u32 %v117, 4294901760
    %v2080 = vsub.f32 %v117, %v2079
    %v2081 = vand.u32 %v2080, 4294901760
    %v2082 = vsub.f32 %v2080, %v2081
    %v2083 = vand.u32 %v2082, 4294901760
    %2084 = vmatpush1.msra.mxu0 %v2083
    %2085 = vmatprep.subr.mxu0 0.0
    %v2086 = vand.u32 %v118, 4294901760
    %v2087 = vsub.f32 %v118, %v2086
    %v2088 = vand.u32 %v2087, 4294901760
    %v2089 = vsub.f32 %v2087, %v2088
    %v2090 = vand.u32 %v2089, 4294901760
    %2091 = vmatpush1.msra.mxu0 %v2090
    %2092 = vmatprep.subr.mxu0 0.0
    %v2093 = vand.u32 %v119, 4294901760
    %v2094 = vsub.f32 %v119, %v2093
    %v2095 = vand.u32 %v2094, 4294901760
    %v2096 = vsub.f32 %v2094, %v2095
    %v2097 = vand.u32 %v2096, 4294901760
    %2098 = vmatpush1.msra.mxu0 %v2097
    %2099 = vmatprep.subr.mxu0 0.0
    %v2100 = vand.u32 %v120, 4294901760
    %v2101 = vsub.f32 %v120, %v2100
    %v2102 = vand.u32 %v2101, 4294901760
    %v2103 = vsub.f32 %v2101, %v2102
    %v2104 = vand.u32 %v2103, 4294901760
    %2105 = vmatpush1.msra.mxu0 %v2104
    %2106 = vmatprep.subr.mxu0 0.0
    %v2107 = vand.u32 %v121, 4294901760
    %v2108 = vsub.f32 %v121, %v2107
    %v2109 = vand.u32 %v2108, 4294901760
    %v2110 = vsub.f32 %v2108, %v2109
    %v2111 = vand.u32 %v2110, 4294901760
    %2112 = vmatpush1.msra.mxu0 %v2111
    %2113 = vmatprep.subr.mxu0 0.0
    %v2114 = vand.u32 %v122, 4294901760
    %v2115 = vsub.f32 %v122, %v2114
    %v2116 = vand.u32 %v2115, 4294901760
    %v2117 = vsub.f32 %v2115, %v2116
    %v2118 = vand.u32 %v2117, 4294901760
    %2119 = vmatpush1.msra.mxu0 %v2118
    %2120 = vmatprep.subr.mxu0 0.0
    %v2121 = vand.u32 %v123, 4294901760
    %v2122 = vsub.f32 %v123, %v2121
    %v2123 = vand.u32 %v2122, 4294901760
    %v2124 = vsub.f32 %v2122, %v2123
    %v2125 = vand.u32 %v2124, 4294901760
    %2126 = vmatpush1.msra.mxu0 %v2125
    %2127 = vmatprep.subr.mxu0 0.0
    %v2128 = vand.u32 %v124, 4294901760
    %v2129 = vsub.f32 %v124, %v2128
    %v2130 = vand.u32 %v2129, 4294901760
    %v2131 = vsub.f32 %v2129, %v2130
    %v2132 = vand.u32 %v2131, 4294901760
    %2133 = vmatpush1.msra.mxu0 %v2132
    %2134 = vmatprep.subr.mxu0 0.0
    %v2135 = vand.u32 %v125, 4294901760
    %v2136 = vsub.f32 %v125, %v2135
    %v2137 = vand.u32 %v2136, 4294901760
    %v2138 = vsub.f32 %v2136, %v2137
    %v2139 = vand.u32 %v2138, 4294901760
    %2140 = vmatpush1.msra.mxu0 %v2139
    %2141 = vmatprep.subr.mxu0 0.0
    %v2142 = vand.u32 %v126, 4294901760
    %v2143 = vsub.f32 %v126, %v2142
    %v2144 = vand.u32 %v2143, 4294901760
    %v2145 = vsub.f32 %v2143, %v2144
    %v2146 = vand.u32 %v2145, 4294901760
    %2147 = vmatpush1.msra.mxu0 %v2146
    %2148 = vmatprep.subr.mxu0 0.0
    %v2149 = vand.u32 %v127, 4294901760
    %v2150 = vsub.f32 %v127, %v2149
    %v2151 = vand.u32 %v2150, 4294901760
    %v2152 = vsub.f32 %v2150, %v2151
    %v2153 = vand.u32 %v2152, 4294901760
    %2154 = vmatpush1.msra.mxu0 %v2153
    %2155 = vmatprep.subr.mxu0 0.0
    %v2156 = vand.u32 %v128, 4294901760
    %v2157 = vsub.f32 %v128, %v2156
    %v2158 = vand.u32 %v2157, 4294901760
    %v2159 = vsub.f32 %v2157, %v2158
    %v2160 = vand.u32 %v2159, 4294901760
    %2161 = vmatpush1.msra.mxu0 %v2160
    %2162 = vmatprep.subr.mxu0 0.0
    %v2163 = vand.u32 %v129, 4294901760
    %v2164 = vsub.f32 %v129, %v2163
    %v2165 = vand.u32 %v2164, 4294901760
    %v2166 = vsub.f32 %v2164, %v2165
    %v2167 = vand.u32 %v2166, 4294901760
    %2168 = vmatpush1.msra.mxu0 %v2167
    %2169 = vmatprep.subr.mxu0 0.0
    %v2170 = vand.u32 %v130, 4294901760
    %v2171 = vsub.f32 %v130, %v2170
    %v2172 = vand.u32 %v2171, 4294901760
    %v2173 = vsub.f32 %v2171, %v2172
    %v2174 = vand.u32 %v2173, 4294901760
    %2175 = vmatpush1.msra.mxu0 %v2174
    %2176 = vmatprep.subr.mxu0 0.0
    %v2177 = vand.u32 %v131, 4294901760
    %v2178 = vsub.f32 %v131, %v2177
    %v2179 = vand.u32 %v2178, 4294901760
    %v2180 = vsub.f32 %v2178, %v2179
    %v2181 = vand.u32 %v2180, 4294901760
    %2182 = vmatpush1.msra.mxu0 %v2181
    %2183 = vmatprep.subr.mxu0 0.0
    %v2184 = vand.u32 %v132, 4294901760
    %v2185 = vsub.f32 %v132, %v2184
    %v2186 = vand.u32 %v2185, 4294901760
    %v2187 = vsub.f32 %v2185, %v2186
    %v2188 = vand.u32 %v2187, 4294901760
    %2189 = vmatpush1.msra.mxu0 %v2188
    %2190 = vmatprep.subr.mxu0 0.0
    %v2191 = vand.u32 %v133, 4294901760
    %v2192 = vsub.f32 %v133, %v2191
    %v2193 = vand.u32 %v2192, 4294901760
    %v2194 = vsub.f32 %v2192, %v2193
    %v2195 = vand.u32 %v2194, 4294901760
    %2196 = vmatpush1.msra.mxu0 %v2195
    %2197 = vmatprep.subr.mxu0 0.0
    %v2198 = vand.u32 %v134, 4294901760
    %v2199 = vsub.f32 %v134, %v2198
    %v2200 = vand.u32 %v2199, 4294901760
    %v2201 = vsub.f32 %v2199, %v2200
    %v2202 = vand.u32 %v2201, 4294901760
    %2203 = vmatpush1.msra.mxu0 %v2202
    %2204 = vmatprep.subr.mxu0 0.0
    %v2205 = vand.u32 %v135, 4294901760
    %v2206 = vsub.f32 %v135, %v2205
    %v2207 = vand.u32 %v2206, 4294901760
    %v2208 = vsub.f32 %v2206, %v2207
    %v2209 = vand.u32 %v2208, 4294901760
    %2210 = vmatpush1.msra.mxu0 %v2209
    %2211 = vmatprep.subr.mxu0 0.0
    %v2212 = vand.u32 %v136, 4294901760
    %v2213 = vsub.f32 %v136, %v2212
    %v2214 = vand.u32 %v2213, 4294901760
    %v2215 = vsub.f32 %v2213, %v2214
    %v2216 = vand.u32 %v2215, 4294901760
    %2217 = vmatpush1.msra.mxu0 %v2216
    %2218 = vmatprep.subr.mxu0 0.0
    %v2219 = vand.u32 %v137, 4294901760
    %v2220 = vsub.f32 %v137, %v2219
    %v2221 = vand.u32 %v2220, 4294901760
    %v2222 = vsub.f32 %v2220, %v2221
    %v2223 = vand.u32 %v2222, 4294901760
    %2224 = vmatpush1.msra.mxu0 %v2223
    %2225 = vmatprep.subr.mxu0 0.0
    %v2226 = vand.u32 %v138, 4294901760
    %v2227 = vsub.f32 %v138, %v2226
    %v2228 = vand.u32 %v2227, 4294901760
    %v2229 = vsub.f32 %v2227, %v2228
    %v2230 = vand.u32 %v2229, 4294901760
    %2231 = vmatpush1.msra.mxu0 %v2230
    %2232 = vmatprep.subr.mxu0 0.0
    %v2233 = vand.u32 %v139, 4294901760
    %v2234 = vsub.f32 %v139, %v2233
    %v2235 = vand.u32 %v2234, 4294901760
    %v2236 = vsub.f32 %v2234, %v2235
    %v2237 = vand.u32 %v2236, 4294901760
    %2238 = vmatpush1.msra.mxu0 %v2237
    %2239 = vmatprep.subr.mxu0 0.0
    %v2240 = vand.u32 %v140, 4294901760
    %v2241 = vsub.f32 %v140, %v2240
    %v2242 = vand.u32 %v2241, 4294901760
    %v2243 = vsub.f32 %v2241, %v2242
    %v2244 = vand.u32 %v2243, 4294901760
    %2245 = vmatpush1.msra.mxu0 %v2244
    %2246 = vmatprep.subr.mxu0 0.0
    %v2247 = vand.u32 %v141, 4294901760
    %v2248 = vsub.f32 %v141, %v2247
    %v2249 = vand.u32 %v2248, 4294901760
    %v2250 = vsub.f32 %v2248, %v2249
    %v2251 = vand.u32 %v2250, 4294901760
    %2252 = vmatpush1.msra.mxu0 %v2251
    %2253 = vmatprep.subr.mxu0 0.0
    %v2254 = vand.u32 %v142, 4294901760
    %v2255 = vsub.f32 %v142, %v2254
    %v2256 = vand.u32 %v2255, 4294901760
    %v2257 = vsub.f32 %v2255, %v2256
    %v2258 = vand.u32 %v2257, 4294901760
    %2259 = vmatpush1.msra.mxu0 %v2258
    %2260 = vmatprep.subr.mxu0 0.0
    %v2261 = vand.u32 %v143, 4294901760
    %v2262 = vsub.f32 %v143, %v2261
    %v2263 = vand.u32 %v2262, 4294901760
    %v2264 = vsub.f32 %v2262, %v2263
    %v2265 = vand.u32 %v2264, 4294901760
    %2266 = vmatpush1.msra.mxu0 %v2265
    %2267 = vmatprep.subr.mxu0 0.0
    %v2268 = vand.u32 %v144, 4294901760
    %v2269 = vsub.f32 %v144, %v2268
    %v2270 = vand.u32 %v2269, 4294901760
    %v2271 = vsub.f32 %v2269, %v2270
    %v2272 = vand.u32 %v2271, 4294901760
    %2273 = vmatpush1.msra.mxu0 %v2272
    %2274 = vmatprep.subr.mxu0 0.0
    %v2275 = vand.u32 %v145, 4294901760
    %v2276 = vsub.f32 %v145, %v2275
    %v2277 = vand.u32 %v2276, 4294901760
    %v2278 = vsub.f32 %v2276, %v2277
    %v2279 = vand.u32 %v2278, 4294901760
    %2280 = vmatpush1.msra.mxu0 %v2279
    %v2281 = vand.u32 %v214, 4294901760
    %2282 = vmatprep.mubr.f32.mxu0 %v2281
    %v2283 = vand.u32 %v213, 4294901760
    %2284 = vmatmul.mubr.f32.gmra.mrb[0].mxu0 %v2283
    %v2285 = vpop.f32.mrb[0].mxu0
    %v2286 = vadd.f32 %v2054, %v2285
    %v2287 = vpop.f32.mrb[0].mxu0
    %2288 = vdwg.mxu0
    %2289 = vmatprep.subr.mxu0 0.0
    %v2290 = vand.u32 %v114, 4294901760
    %v2291 = vsub.f32 %v114, %v2290
    %2292 = vmatpush1.msra.mxu0 %v2291
    %2293 = vmatprep.subr.mxu0 0.0
    %v2294 = vand.u32 %v115, 4294901760
    %v2295 = vsub.f32 %v115, %v2294
    %2296 = vmatpush1.msra.mxu0 %v2295
    %2297 = vmatprep.subr.mxu0 0.0
    %v2298 = vand.u32 %v116, 4294901760
    %v2299 = vsub.f32 %v116, %v2298
    %2300 = vmatpush1.msra.mxu0 %v2299
    %2301 = vmatprep.subr.mxu0 0.0
    %v2302 = vand.u32 %v117, 4294901760
    %v2303 = vsub.f32 %v117, %v2302
    %2304 = vmatpush1.msra.mxu0 %v2303
    %2305 = vmatprep.subr.mxu0 0.0
    %v2306 = vand.u32 %v118, 4294901760
    %v2307 = vsub.f32 %v118, %v2306
    %2308 = vmatpush1.msra.mxu0 %v2307
    %2309 = vmatprep.subr.mxu0 0.0
    %v2310 = vand.u32 %v119, 4294901760
    %v2311 = vsub.f32 %v119, %v2310
    %2312 = vmatpush1.msra.mxu0 %v2311
    %2313 = vmatprep.subr.mxu0 0.0
    %v2314 = vand.u32 %v120, 4294901760
    %v2315 = vsub.f32 %v120, %v2314
    %2316 = vmatpush1.msra.mxu0 %v2315
    %2317 = vmatprep.subr.mxu0 0.0
    %v2318 = vand.u32 %v121, 4294901760
    %v2319 = vsub.f32 %v121, %v2318
    %2320 = vmatpush1.msra.mxu0 %v2319
    %2321 = vmatprep.subr.mxu0 0.0
    %v2322 = vand.u32 %v122, 4294901760
    %v2323 = vsub.f32 %v122, %v2322
    %2324 = vmatpush1.msra.mxu0 %v2323
    %2325 = vmatprep.subr.mxu0 0.0
    %v2326 = vand.u32 %v123, 4294901760
    %v2327 = vsub.f32 %v123, %v2326
    %2328 = vmatpush1.msra.mxu0 %v2327
    %2329 = vmatprep.subr.mxu0 0.0
    %v2330 = vand.u32 %v124, 4294901760
    %v2331 = vsub.f32 %v124, %v2330
    %2332 = vmatpush1.msra.mxu0 %v2331
    %2333 = vmatprep.subr.mxu0 0.0
    %v2334 = vand.u32 %v125, 4294901760
    %v2335 = vsub.f32 %v125, %v2334
    %2336 = vmatpush1.msra.mxu0 %v2335
    %2337 = vmatprep.subr.mxu0 0.0
    %v2338 = vand.u32 %v126, 4294901760
    %v2339 = vsub.f32 %v126, %v2338
    %2340 = vmatpush1.msra.mxu0 %v2339
    %2341 = vmatprep.subr.mxu0 0.0
    %v2342 = vand.u32 %v127, 4294901760
    %v2343 = vsub.f32 %v127, %v2342
    %2344 = vmatpush1.msra.mxu0 %v2343
    %2345 = vmatprep.subr.mxu0 0.0
    %v2346 = vand.u32 %v128, 4294901760
    %v2347 = vsub.f32 %v128, %v2346
    %2348 = vmatpush1.msra.mxu0 %v2347
    %2349 = vmatprep.subr.mxu0 0.0
    %v2350 = vand.u32 %v129, 4294901760
    %v2351 = vsub.f32 %v129, %v2350
    %2352 = vmatpush1.msra.mxu0 %v2351
    %2353 = vmatprep.subr.mxu0 0.0
    %v2354 = vand.u32 %v130, 4294901760
    %v2355 = vsub.f32 %v130, %v2354
    %2356 = vmatpush1.msra.mxu0 %v2355
    %2357 = vmatprep.subr.mxu0 0.0
    %v2358 = vand.u32 %v131, 4294901760
    %v2359 = vsub.f32 %v131, %v2358
    %2360 = vmatpush1.msra.mxu0 %v2359
    %2361 = vmatprep.subr.mxu0 0.0
    %v2362 = vand.u32 %v132, 4294901760
    %v2363 = vsub.f32 %v132, %v2362
    %2364 = vmatpush1.msra.mxu0 %v2363
    %2365 = vmatprep.subr.mxu0 0.0
    %v2366 = vand.u32 %v133, 4294901760
    %v2367 = vsub.f32 %v133, %v2366
    %2368 = vmatpush1.msra.mxu0 %v2367
    %2369 = vmatprep.subr.mxu0 0.0
    %v2370 = vand.u32 %v134, 4294901760
    %v2371 = vsub.f32 %v134, %v2370
    %2372 = vmatpush1.msra.mxu0 %v2371
    %2373 = vmatprep.subr.mxu0 0.0
    %v2374 = vand.u32 %v135, 4294901760
    %v2375 = vsub.f32 %v135, %v2374
    %2376 = vmatpush1.msra.mxu0 %v2375
    %2377 = vmatprep.subr.mxu0 0.0
    %v2378 = vand.u32 %v136, 4294901760
    %v2379 = vsub.f32 %v136, %v2378
    %2380 = vmatpush1.msra.mxu0 %v2379
    %2381 = vmatprep.subr.mxu0 0.0
    %v2382 = vand.u32 %v137, 4294901760
    %v2383 = vsub.f32 %v137, %v2382
    %2384 = vmatpush1.msra.mxu0 %v2383
    %2385 = vmatprep.subr.mxu0 0.0
    %v2386 = vand.u32 %v138, 4294901760
    %v2387 = vsub.f32 %v138, %v2386
    %2388 = vmatpush1.msra.mxu0 %v2387
    %2389 = vmatprep.subr.mxu0 0.0
    %v2390 = vand.u32 %v139, 4294901760
    %v2391 = vsub.f32 %v139, %v2390
    %2392 = vmatpush1.msra.mxu0 %v2391
    %2393 = vmatprep.subr.mxu0 0.0
    %v2394 = vand.u32 %v140, 4294901760
    %v2395 = vsub.f32 %v140, %v2394
    %2396 = vmatpush1.msra.mxu0 %v2395
    %2397 = vmatprep.subr.mxu0 0.0
    %v2398 = vand.u32 %v141, 4294901760
    %v2399 = vsub.f32 %v141, %v2398
    %2400 = vmatpush1.msra.mxu0 %v2399
    %2401 = vmatprep.subr.mxu0 0.0
    %v2402 = vand.u32 %v142, 4294901760
    %v2403 = vsub.f32 %v142, %v2402
    %2404 = vmatpush1.msra.mxu0 %v2403
    %2405 = vmatprep.subr.mxu0 0.0
    %v2406 = vand.u32 %v143, 4294901760
    %v2407 = vsub.f32 %v143, %v2406
    %2408 = vmatpush1.msra.mxu0 %v2407
    %2409 = vmatprep.subr.mxu0 0.0
    %v2410 = vand.u32 %v144, 4294901760
    %v2411 = vsub.f32 %v144, %v2410
    %2412 = vmatpush1.msra.mxu0 %v2411
    %2413 = vmatprep.subr.mxu0 0.0
    %v2414 = vand.u32 %v145, 4294901760
    %v2415 = vsub.f32 %v145, %v2414
    %2416 = vmatpush1.msra.mxu0 %v2415
    %v2417 = vand.u32 %v214, 4294901760
    %v2418 = vsub.f32 %v214, %v2417
    %2419 = vmatprep.mubr.f32.mxu0 %v2418
    %v2420 = vand.u32 %v213, 4294901760
    %v2421 = vsub.f32 %v213, %v2420
    %2422 = vmatmul.mubr.f32.gmra.mrb[0].mxu0 %v2421
    %v2423 = vpop.f32.mrb[0].mxu0
    %v2424 = vadd.f32 %v2286, %v2423
    %v2425 = vpop.f32.mrb[0].mxu0
    %2426 = vdwg.mxu0
    %2427 = vmatprep.subr.mxu0 0.0
    %v2428 = vand.u32 %v114, 4294901760
    %2429 = vmatpush1.msra.mxu0 %v2428
    %2430 = vmatprep.subr.mxu0 0.0
    %v2431 = vand.u32 %v115, 4294901760
    %2432 = vmatpush1.msra.mxu0 %v2431
    %2433 = vmatprep.subr.mxu0 0.0
    %v2434 = vand.u32 %v116, 4294901760
    %2435 = vmatpush1.msra.mxu0 %v2434
    %2436 = vmatprep.subr.mxu0 0.0
    %v2437 = vand.u32 %v117, 4294901760
    %2438 = vmatpush1.msra.mxu0 %v2437
    %2439 = vmatprep.subr.mxu0 0.0
    %v2440 = vand.u32 %v118, 4294901760
    %2441 = vmatpush1.msra.mxu0 %v2440
    %2442 = vmatprep.subr.mxu0 0.0
    %v2443 = vand.u32 %v119, 4294901760
    %2444 = vmatpush1.msra.mxu0 %v2443
    %2445 = vmatprep.subr.mxu0 0.0
    %v2446 = vand.u32 %v120, 4294901760
    %2447 = vmatpush1.msra.mxu0 %v2446
    %2448 = vmatprep.subr.mxu0 0.0
    %v2449 = vand.u32 %v121, 4294901760
    %2450 = vmatpush1.msra.mxu0 %v2449
    %2451 = vmatprep.subr.mxu0 0.0
    %v2452 = vand.u32 %v122, 4294901760
    %2453 = vmatpush1.msra.mxu0 %v2452
    %2454 = vmatprep.subr.mxu0 0.0
    %v2455 = vand.u32 %v123, 4294901760
    %2456 = vmatpush1.msra.mxu0 %v2455
    %2457 = vmatprep.subr.mxu0 0.0
    %v2458 = vand.u32 %v124, 4294901760
    %2459 = vmatpush1.msra.mxu0 %v2458
    %2460 = vmatprep.subr.mxu0 0.0
    %v2461 = vand.u32 %v125, 4294901760
    %2462 = vmatpush1.msra.mxu0 %v2461
    %2463 = vmatprep.subr.mxu0 0.0
    %v2464 = vand.u32 %v126, 4294901760
    %2465 = vmatpush1.msra.mxu0 %v2464
    %2466 = vmatprep.subr.mxu0 0.0
    %v2467 = vand.u32 %v127, 4294901760
    %2468 = vmatpush1.msra.mxu0 %v2467
    %2469 = vmatprep.subr.mxu0 0.0
    %v2470 = vand.u32 %v128, 4294901760
    %2471 = vmatpush1.msra.mxu0 %v2470
    %2472 = vmatprep.subr.mxu0 0.0
    %v2473 = vand.u32 %v129, 4294901760
    %2474 = vmatpush1.msra.mxu0 %v2473
    %2475 = vmatprep.subr.mxu0 0.0
    %v2476 = vand.u32 %v130, 4294901760
    %2477 = vmatpush1.msra.mxu0 %v2476
    %2478 = vmatprep.subr.mxu0 0.0
    %v2479 = vand.u32 %v131, 4294901760
    %2480 = vmatpush1.msra.mxu0 %v2479
    %2481 = vmatprep.subr.mxu0 0.0
    %v2482 = vand.u32 %v132, 4294901760
    %2483 = vmatpush1.msra.mxu0 %v2482
    %2484 = vmatprep.subr.mxu0 0.0
    %v2485 = vand.u32 %v133, 4294901760
    %2486 = vmatpush1.msra.mxu0 %v2485
    %2487 = vmatprep.subr.mxu0 0.0
    %v2488 = vand.u32 %v134, 4294901760
    %2489 = vmatpush1.msra.mxu0 %v2488
    %2490 = vmatprep.subr.mxu0 0.0
    %v2491 = vand.u32 %v135, 4294901760
    %2492 = vmatpush1.msra.mxu0 %v2491
    %2493 = vmatprep.subr.mxu0 0.0
    %v2494 = vand.u32 %v136, 4294901760
    %2495 = vmatpush1.msra.mxu0 %v2494
    %2496 = vmatprep.subr.mxu0 0.0
    %v2497 = vand.u32 %v137, 4294901760
    %2498 = vmatpush1.msra.mxu0 %v2497
    %2499 = vmatprep.subr.mxu0 0.0
    %v2500 = vand.u32 %v138, 4294901760
    %2501 = vmatpush1.msra.mxu0 %v2500
    %2502 = vmatprep.subr.mxu0 0.0
    %v2503 = vand.u32 %v139, 4294901760
    %2504 = vmatpush1.msra.mxu0 %v2503
    %2505 = vmatprep.subr.mxu0 0.0
    %v2506 = vand.u32 %v140, 4294901760
    %2507 = vmatpush1.msra.mxu0 %v2506
    %2508 = vmatprep.subr.mxu0 0.0
    %v2509 = vand.u32 %v141, 4294901760
    %2510 = vmatpush1.msra.mxu0 %v2509
    %2511 = vmatprep.subr.mxu0 0.0
    %v2512 = vand.u32 %v142, 4294901760
    %2513 = vmatpush1.msra.mxu0 %v2512
    %2514 = vmatprep.subr.mxu0 0.0
    %v2515 = vand.u32 %v143, 4294901760
    %2516 = vmatpush1.msra.mxu0 %v2515
    %2517 = vmatprep.subr.mxu0 0.0
    %v2518 = vand.u32 %v144, 4294901760
    %2519 = vmatpush1.msra.mxu0 %v2518
    %2520 = vmatprep.subr.mxu0 0.0
    %v2521 = vand.u32 %v145, 4294901760
    %2522 = vmatpush1.msra.mxu0 %v2521
    %v2523 = vand.u32 %v214, 4294901760
    %v2524 = vsub.f32 %v214, %v2523
    %v2525 = vand.u32 %v2524, 4294901760
    %2526 = vmatprep.mubr.f32.mxu0 %v2525
    %v2527 = vand.u32 %v213, 4294901760
    %v2528 = vsub.f32 %v213, %v2527
    %v2529 = vand.u32 %v2528, 4294901760
    %2530 = vmatmul.mubr.f32.gmra.mrb[0].mxu0 %v2529
    %v2531 = vpop.f32.mrb[0].mxu0
    %v2532 = vadd.f32 %v2424, %v2531
    %v2533 = vpop.f32.mrb[0].mxu0
    %2534 = vdwg.mxu0
    %2535 = vmatprep.subr.mxu0 0.0
    %v2536 = vand.u32 %v114, 4294901760
    %v2537 = vsub.f32 %v114, %v2536
    %v2538 = vand.u32 %v2537, 4294901760
    %2539 = vmatpush1.msra.mxu0 %v2538
    %2540 = vmatprep.subr.mxu0 0.0
    %v2541 = vand.u32 %v115, 4294901760
    %v2542 = vsub.f32 %v115, %v2541
    %v2543 = vand.u32 %v2542, 4294901760
    %2544 = vmatpush1.msra.mxu0 %v2543
    %2545 = vmatprep.subr.mxu0 0.0
    %v2546 = vand.u32 %v116, 4294901760
    %v2547 = vsub.f32 %v116, %v2546
    %v2548 = vand.u32 %v2547, 4294901760
    %2549 = vmatpush1.msra.mxu0 %v2548
    %2550 = vmatprep.subr.mxu0 0.0
    %v2551 = vand.u32 %v117, 4294901760
    %v2552 = vsub.f32 %v117, %v2551
    %v2553 = vand.u32 %v2552, 4294901760
    %2554 = vmatpush1.msra.mxu0 %v2553
    %2555 = vmatprep.subr.mxu0 0.0
    %v2556 = vand.u32 %v118, 4294901760
    %v2557 = vsub.f32 %v118, %v2556
    %v2558 = vand.u32 %v2557, 4294901760
    %2559 = vmatpush1.msra.mxu0 %v2558
    %2560 = vmatprep.subr.mxu0 0.0
    %v2561 = vand.u32 %v119, 4294901760
    %v2562 = vsub.f32 %v119, %v2561
    %v2563 = vand.u32 %v2562, 4294901760
    %2564 = vmatpush1.msra.mxu0 %v2563
    %2565 = vmatprep.subr.mxu0 0.0
    %v2566 = vand.u32 %v120, 4294901760
    %v2567 = vsub.f32 %v120, %v2566
    %v2568 = vand.u32 %v2567, 4294901760
    %2569 = vmatpush1.msra.mxu0 %v2568
    %2570 = vmatprep.subr.mxu0 0.0
    %v2571 = vand.u32 %v121, 4294901760
    %v2572 = vsub.f32 %v121, %v2571
    %v2573 = vand.u32 %v2572, 4294901760
    %2574 = vmatpush1.msra.mxu0 %v2573
    %2575 = vmatprep.subr.mxu0 0.0
    %v2576 = vand.u32 %v122, 4294901760
    %v2577 = vsub.f32 %v122, %v2576
    %v2578 = vand.u32 %v2577, 4294901760
    %2579 = vmatpush1.msra.mxu0 %v2578
    %2580 = vmatprep.subr.mxu0 0.0
    %v2581 = vand.u32 %v123, 4294901760
    %v2582 = vsub.f32 %v123, %v2581
    %v2583 = vand.u32 %v2582, 4294901760
    %2584 = vmatpush1.msra.mxu0 %v2583
    %2585 = vmatprep.subr.mxu0 0.0
    %v2586 = vand.u32 %v124, 4294901760
    %v2587 = vsub.f32 %v124, %v2586
    %v2588 = vand.u32 %v2587, 4294901760
    %2589 = vmatpush1.msra.mxu0 %v2588
    %2590 = vmatprep.subr.mxu0 0.0
    %v2591 = vand.u32 %v125, 4294901760
    %v2592 = vsub.f32 %v125, %v2591
    %v2593 = vand.u32 %v2592, 4294901760
    %2594 = vmatpush1.msra.mxu0 %v2593
    %2595 = vmatprep.subr.mxu0 0.0
    %v2596 = vand.u32 %v126, 4294901760
    %v2597 = vsub.f32 %v126, %v2596
    %v2598 = vand.u32 %v2597, 4294901760
    %2599 = vmatpush1.msra.mxu0 %v2598
    %2600 = vmatprep.subr.mxu0 0.0
    %v2601 = vand.u32 %v127, 4294901760
    %v2602 = vsub.f32 %v127, %v2601
    %v2603 = vand.u32 %v2602, 4294901760
    %2604 = vmatpush1.msra.mxu0 %v2603
    %2605 = vmatprep.subr.mxu0 0.0
    %v2606 = vand.u32 %v128, 4294901760
    %v2607 = vsub.f32 %v128, %v2606
    %v2608 = vand.u32 %v2607, 4294901760
    %2609 = vmatpush1.msra.mxu0 %v2608
    %2610 = vmatprep.subr.mxu0 0.0
    %v2611 = vand.u32 %v129, 4294901760
    %v2612 = vsub.f32 %v129, %v2611
    %v2613 = vand.u32 %v2612, 4294901760
    %2614 = vmatpush1.msra.mxu0 %v2613
    %2615 = vmatprep.subr.mxu0 0.0
    %v2616 = vand.u32 %v130, 4294901760
    %v2617 = vsub.f32 %v130, %v2616
    %v2618 = vand.u32 %v2617, 4294901760
    %2619 = vmatpush1.msra.mxu0 %v2618
    %2620 = vmatprep.subr.mxu0 0.0
    %v2621 = vand.u32 %v131, 4294901760
    %v2622 = vsub.f32 %v131, %v2621
    %v2623 = vand.u32 %v2622, 4294901760
    %2624 = vmatpush1.msra.mxu0 %v2623
    %2625 = vmatprep.subr.mxu0 0.0
    %v2626 = vand.u32 %v132, 4294901760
    %v2627 = vsub.f32 %v132, %v2626
    %v2628 = vand.u32 %v2627, 4294901760
    %2629 = vmatpush1.msra.mxu0 %v2628
    %2630 = vmatprep.subr.mxu0 0.0
    %v2631 = vand.u32 %v133, 4294901760
    %v2632 = vsub.f32 %v133, %v2631
    %v2633 = vand.u32 %v2632, 4294901760
    %2634 = vmatpush1.msra.mxu0 %v2633
    %2635 = vmatprep.subr.mxu0 0.0
    %v2636 = vand.u32 %v134, 4294901760
    %v2637 = vsub.f32 %v134, %v2636
    %v2638 = vand.u32 %v2637, 4294901760
    %2639 = vmatpush1.msra.mxu0 %v2638
    %2640 = vmatprep.subr.mxu0 0.0
    %v2641 = vand.u32 %v135, 4294901760
    %v2642 = vsub.f32 %v135, %v2641
    %v2643 = vand.u32 %v2642, 4294901760
    %2644 = vmatpush1.msra.mxu0 %v2643
    %2645 = vmatprep.subr.mxu0 0.0
    %v2646 = vand.u32 %v136, 4294901760
    %v2647 = vsub.f32 %v136, %v2646
    %v2648 = vand.u32 %v2647, 4294901760
    %2649 = vmatpush1.msra.mxu0 %v2648
    %2650 = vmatprep.subr.mxu0 0.0
    %v2651 = vand.u32 %v137, 4294901760
    %v2652 = vsub.f32 %v137, %v2651
    %v2653 = vand.u32 %v2652, 4294901760
    %2654 = vmatpush1.msra.mxu0 %v2653
    %2655 = vmatprep.subr.mxu0 0.0
    %v2656 = vand.u32 %v138, 4294901760
    %v2657 = vsub.f32 %v138, %v2656
    %v2658 = vand.u32 %v2657, 4294901760
    %2659 = vmatpush1.msra.mxu0 %v2658
    %2660 = vmatprep.subr.mxu0 0.0
    %v2661 = vand.u32 %v139, 4294901760
    %v2662 = vsub.f32 %v139, %v2661
    %v2663 = vand.u32 %v2662, 4294901760
    %2664 = vmatpush1.msra.mxu0 %v2663
    %2665 = vmatprep.subr.mxu0 0.0
    %v2666 = vand.u32 %v140, 4294901760
    %v2667 = vsub.f32 %v140, %v2666
    %v2668 = vand.u32 %v2667, 4294901760
    %2669 = vmatpush1.msra.mxu0 %v2668
    %2670 = vmatprep.subr.mxu0 0.0
    %v2671 = vand.u32 %v141, 4294901760
    %v2672 = vsub.f32 %v141, %v2671
    %v2673 = vand.u32 %v2672, 4294901760
    %2674 = vmatpush1.msra.mxu0 %v2673
    %2675 = vmatprep.subr.mxu0 0.0
    %v2676 = vand.u32 %v142, 4294901760
    %v2677 = vsub.f32 %v142, %v2676
    %v2678 = vand.u32 %v2677, 4294901760
    %2679 = vmatpush1.msra.mxu0 %v2678
    %2680 = vmatprep.subr.mxu0 0.0
    %v2681 = vand.u32 %v143, 4294901760
    %v2682 = vsub.f32 %v143, %v2681
    %v2683 = vand.u32 %v2682, 4294901760
    %2684 = vmatpush1.msra.mxu0 %v2683
    %2685 = vmatprep.subr.mxu0 0.0
    %v2686 = vand.u32 %v144, 4294901760
    %v2687 = vsub.f32 %v144, %v2686
    %v2688 = vand.u32 %v2687, 4294901760
    %2689 = vmatpush1.msra.mxu0 %v2688
    %2690 = vmatprep.subr.mxu0 0.0
    %v2691 = vand.u32 %v145, 4294901760
    %v2692 = vsub.f32 %v145, %v2691
    %v2693 = vand.u32 %v2692, 4294901760
    %2694 = vmatpush1.msra.mxu0 %v2693
    %v2695 = vand.u32 %v214, 4294901760
    %2696 = vmatprep.mubr.f32.mxu0 %v2695
    %v2697 = vand.u32 %v213, 4294901760
    %2698 = vmatmul.mubr.f32.gmra.mrb[0].mxu0 %v2697
    %v2699 = vpop.f32.mrb[0].mxu0
    %v2700 = vadd.f32 %v2532, %v2699
    %v2701 = vpop.f32.mrb[0].mxu0
    %2702 = vdwg.mxu0
    %2703 = vmatprep.subr.mxu0 0.0
    %v2704 = vand.u32 %v114, 4294901760
    %2705 = vmatpush1.msra.mxu0 %v2704
    %2706 = vmatprep.subr.mxu0 0.0
    %v2707 = vand.u32 %v115, 4294901760
    %2708 = vmatpush1.msra.mxu0 %v2707
    %2709 = vmatprep.subr.mxu0 0.0
    %v2710 = vand.u32 %v116, 4294901760
    %2711 = vmatpush1.msra.mxu0 %v2710
    %2712 = vmatprep.subr.mxu0 0.0
    %v2713 = vand.u32 %v117, 4294901760
    %2714 = vmatpush1.msra.mxu0 %v2713
    %2715 = vmatprep.subr.mxu0 0.0
    %v2716 = vand.u32 %v118, 4294901760
    %2717 = vmatpush1.msra.mxu0 %v2716
    %2718 = vmatprep.subr.mxu0 0.0
    %v2719 = vand.u32 %v119, 4294901760
    %2720 = vmatpush1.msra.mxu0 %v2719
    %2721 = vmatprep.subr.mxu0 0.0
    %v2722 = vand.u32 %v120, 4294901760
    %2723 = vmatpush1.msra.mxu0 %v2722
    %2724 = vmatprep.subr.mxu0 0.0
    %v2725 = vand.u32 %v121, 4294901760
    %2726 = vmatpush1.msra.mxu0 %v2725
    %2727 = vmatprep.subr.mxu0 0.0
    %v2728 = vand.u32 %v122, 4294901760
    %2729 = vmatpush1.msra.mxu0 %v2728
    %2730 = vmatprep.subr.mxu0 0.0
    %v2731 = vand.u32 %v123, 4294901760
    %2732 = vmatpush1.msra.mxu0 %v2731
    %2733 = vmatprep.subr.mxu0 0.0
    %v2734 = vand.u32 %v124, 4294901760
    %2735 = vmatpush1.msra.mxu0 %v2734
    %2736 = vmatprep.subr.mxu0 0.0
    %v2737 = vand.u32 %v125, 4294901760
    %2738 = vmatpush1.msra.mxu0 %v2737
    %2739 = vmatprep.subr.mxu0 0.0
    %v2740 = vand.u32 %v126, 4294901760
    %2741 = vmatpush1.msra.mxu0 %v2740
    %2742 = vmatprep.subr.mxu0 0.0
    %v2743 = vand.u32 %v127, 4294901760
    %2744 = vmatpush1.msra.mxu0 %v2743
    %2745 = vmatprep.subr.mxu0 0.0
    %v2746 = vand.u32 %v128, 4294901760
    %2747 = vmatpush1.msra.mxu0 %v2746
    %2748 = vmatprep.subr.mxu0 0.0
    %v2749 = vand.u32 %v129, 4294901760
    %2750 = vmatpush1.msra.mxu0 %v2749
    %2751 = vmatprep.subr.mxu0 0.0
    %v2752 = vand.u32 %v130, 4294901760
    %2753 = vmatpush1.msra.mxu0 %v2752
    %2754 = vmatprep.subr.mxu0 0.0
    %v2755 = vand.u32 %v131, 4294901760
    %2756 = vmatpush1.msra.mxu0 %v2755
    %2757 = vmatprep.subr.mxu0 0.0
    %v2758 = vand.u32 %v132, 4294901760
    %2759 = vmatpush1.msra.mxu0 %v2758
    %2760 = vmatprep.subr.mxu0 0.0
    %v2761 = vand.u32 %v133, 4294901760
    %2762 = vmatpush1.msra.mxu0 %v2761
    %2763 = vmatprep.subr.mxu0 0.0
    %v2764 = vand.u32 %v134, 4294901760
    %2765 = vmatpush1.msra.mxu0 %v2764
    %2766 = vmatprep.subr.mxu0 0.0
    %v2767 = vand.u32 %v135, 4294901760
    %2768 = vmatpush1.msra.mxu0 %v2767
    %2769 = vmatprep.subr.mxu0 0.0
    %v2770 = vand.u32 %v136, 4294901760
    %2771 = vmatpush1.msra.mxu0 %v2770
    %2772 = vmatprep.subr.mxu0 0.0
    %v2773 = vand.u32 %v137, 4294901760
    %2774 = vmatpush1.msra.mxu0 %v2773
    %2775 = vmatprep.subr.mxu0 0.0
    %v2776 = vand.u32 %v138, 4294901760
    %2777 = vmatpush1.msra.mxu0 %v2776
    %2778 = vmatprep.subr.mxu0 0.0
    %v2779 = vand.u32 %v139, 4294901760
    %2780 = vmatpush1.msra.mxu0 %v2779
    %2781 = vmatprep.subr.mxu0 0.0
    %v2782 = vand.u32 %v140, 4294901760
    %2783 = vmatpush1.msra.mxu0 %v2782
    %2784 = vmatprep.subr.mxu0 0.0
    %v2785 = vand.u32 %v141, 4294901760
    %2786 = vmatpush1.msra.mxu0 %v2785
    %2787 = vmatprep.subr.mxu0 0.0
    %v2788 = vand.u32 %v142, 4294901760
    %2789 = vmatpush1.msra.mxu0 %v2788
    %2790 = vmatprep.subr.mxu0 0.0
    %v2791 = vand.u32 %v143, 4294901760
    %2792 = vmatpush1.msra.mxu0 %v2791
    %2793 = vmatprep.subr.mxu0 0.0
    %v2794 = vand.u32 %v144, 4294901760
    %2795 = vmatpush1.msra.mxu0 %v2794
    %2796 = vmatprep.subr.mxu0 0.0
    %v2797 = vand.u32 %v145, 4294901760
    %2798 = vmatpush1.msra.mxu0 %v2797
    %v2799 = vand.u32 %v214, 4294901760
    %2800 = vmatprep.mubr.f32.mxu0 %v2799
    %v2801 = vand.u32 %v213, 4294901760
    %2802 = vmatmul.mubr.f32.gmra.mrb[0].mxu0 %v2801
    %v2803 = vpop.f32.mrb[0].mxu0
    %v2804 = vadd.f32 %v2700, %v2803
    %v2805 = vpop.f32.mrb[0].mxu0
    %2806 = vdwg.mxu0
    %vm2807 = vcmask 7168
    %2808 = vst.msk [vmem:[#allocation6] sm:$0xff] %vm2807, %v2804
    // Predicated region
    $region22: #{aesthetic_predictor_forward.1} parent=1 // pred_check
      _
    $region23: #{aesthetic_predictor_forward.1} parent=1 // pred_check_branch
      %2810 = sbr.rel (0) target = $region25
    $region24: #{aesthetic_predictor_forward.1} parent=1 // pred_region
      // Predicated region
      $region26: #{aesthetic_predictor_forward.1} parent=24 // pred_check
        _
      $region27: #{aesthetic_predictor_forward.1} parent=24 // pred_check_branch
        %2812 = sbr.rel (0) target = $region29
      $region28: #{aesthetic_predictor_forward.1} parent=24 // pred_region
        // Predicated region
        $region30: #{aesthetic_predictor_forward.1} parent=28 // pred_check
          _
        $region31: #{aesthetic_predictor_forward.1} parent=28 // pred_check_branch
          %2814 = sbr.rel target = $region33
        $region32: #{aesthetic_predictor_forward.1} parent=28 // pred_region
          // Predicated region
          $region45: #{aesthetic_predictor_forward.1} parent=32 // pred_check
            _
          $region46: #{aesthetic_predictor_forward.1} parent=32 // pred_check_branch
            %2829 = sbr.rel (0) target = $region48
          $region47: #{aesthetic_predictor_forward.1} parent=32 // pred_region
            loop: start=0, step=1, limit=1
            $region49: #{aesthetic_predictor_forward.1} parent=47 // loop_pre_header
              _
            $region50: #{aesthetic_predictor_forward.1} parent=47 // loop_header
              %s2832 = sphi 0, %s2836
              %p2833 = scmp.ge.s32.totalorder %s2832, 1
              %s2837 = sphi [#allocation6], [#allocation6]
              %s2838 = sphi %s3, %s3
            $region51: #{aesthetic_predictor_forward.1} parent=47 // loop_header_branch
              %2835 = sbr.rel (%p2833) target = $region55
            $region52: #{aesthetic_predictor_forward.1} parent=47 // loop_body
              %v2839 = vld [vmem:[%s2837] sm:$0x3]
              %2840 = vst [vmem:[%s2838] sm:$0x3] %v2839
            $region53: #{aesthetic_predictor_forward.1} parent=47 // loop_footer
              %s2836 = sadd.s32 1, %s2832
            $region54: #{aesthetic_predictor_forward.1} parent=47 // loop_footer_branch
              %2831 = sbr.rel target = $region50
            $region55: #{aesthetic_predictor_forward.1} parent=47 // loop_exit
              _
          $region48: #{aesthetic_predictor_forward.1} parent=32 // pred_fallthru
            _
        $region33: #{aesthetic_predictor_forward.1} parent=28 // pred_fallthru
          _
        // Predicated region
        $region34: #{aesthetic_predictor_forward.1} parent=28 // pred_check
          _
        $region35: #{aesthetic_predictor_forward.1} parent=28 // pred_check_branch
          %2816 = sbr.rel (0) target = $region37
        $region36: #{aesthetic_predictor_forward.1} parent=28 // pred_region
          loop: start=0, step=1, limit=1
          $region38: #{aesthetic_predictor_forward.1} parent=36 // loop_pre_header
            _
          $region39: #{aesthetic_predictor_forward.1} parent=36 // loop_header
            %s2819 = sphi 0, %s2823
            %p2820 = scmp.ge.s32.totalorder %s2819, 1
            %s2824 = sphi [#allocation6], [#allocation6]
            %s2825 = sphi %s3, %s3
          $region40: #{aesthetic_predictor_forward.1} parent=36 // loop_header_branch
            %2822 = sbr.rel (%p2820) target = $region44
          $region41: #{aesthetic_predictor_forward.1} parent=36 // loop_body
            %v2826 = vld [vmem:[%s2824] sm:$0x3]
            %2827 = vst [vmem:[%s2825] sm:$0x3] %v2826
          $region42: #{aesthetic_predictor_forward.1} parent=36 // loop_footer
            %s2823 = sadd.s32 1, %s2819
          $region43: #{aesthetic_predictor_forward.1} parent=36 // loop_footer_branch
            %2818 = sbr.rel target = $region39
          $region44: #{aesthetic_predictor_forward.1} parent=36 // loop_exit
            _
        $region37: #{aesthetic_predictor_forward.1} parent=28 // pred_fallthru
          _
      $region29: #{aesthetic_predictor_forward.1} parent=24 // pred_fallthru
        _
      %2841 = vnop
    $region25: #{aesthetic_predictor_forward.1} parent=1 // pred_fallthru
      _
    // Predicated region
    $region56: #{aesthetic_predictor_forward.1} parent=1 // pred_check
      _
    $region57: #{aesthetic_predictor_forward.1} parent=1 // pred_check_branch
      %2843 = sbr.rel (0) target = $region59
    $region58: #{aesthetic_predictor_forward.1} parent=1 // pred_region
      _
    $region59: #{aesthetic_predictor_forward.1} parent=1 // pred_fallthru
      _
    %2844 = vsyncpa [#allocation3], 1
    %2845 = vsyncpa [#allocation5], 1

</llo_original>
